<compile_context>
chip_gen: v6e
topology: v6e:2x2x1
jax: 0.10.0
libtpu: 0.0.40
codegen_flags: <defaults>
</compile_context>

<pallas_src>
import jax
import jax.numpy as jnp
from jax.experimental import pallas as pl
from jax.experimental.pallas import tpu as pltpu


# ---------------------------------------------------------------------------
# Kernels
# ---------------------------------------------------------------------------

def _sigmoid(x):
    # EUP exp + approx reciprocal: the divide leaves the VALU path.
    return pl.reciprocal(1.0 + jnp.exp(-x), approx=True)


def _sgnn_kernel_resident(xT_ref, aT_ref, wp_ref, wq_ref, s_up_ref, s_dn_ref,
                          a_up_ref, a_dn_ref, w_out_ref, b_out_ref, out_ref):
    """Everything VMEM-resident.  Working layout is transposed (H, N)."""
    f32, bf16 = jnp.float32, jnp.bfloat16

    xT = xT_ref[...]                       # (F, Np) f32
    AT = aT_ref[...]                       # (Np, Np) bf16, AT[src, dst]

    # Input linears (tiny contraction F); keep f32 at the entry point.
    p = jnp.dot(wp_ref[...], xT, preferred_element_type=f32)    # (H, Np)
    q = jnp.dot(wq_ref[...], xT, preferred_element_type=f32)    # (H, Np)

    num_h_layers = a_up_ref.shape[0]       # static

    def aggregate(h, S_bf16):
        # (N, H) semantics: A @ (h @ S).  Transposed: (S @ hT) @ AT (S symmetric).
        msg = jnp.dot(S_bf16, h.astype(bf16), preferred_element_type=f32)
        return jnp.dot(msg.astype(bf16), AT, preferred_element_type=f32)

    # TODO(synk): swap to lax.fori_loop carrying (p, q) if num_h_layers > ~8.
    for l in range(num_h_layers):
        p = p + aggregate(q, s_up_ref[l])          # LAMessagePassingUp
        q = q + aggregate(p, s_dn_ref[l])          # LAMessagePassingDown
        p = p + a_up_ref[l] * _sigmoid(q)          # ActivationUpModule
        q = q + a_dn_ref[l] * _sigmoid(p)          # ActivationDownModule

    # Final layer: (up, down) only.
    p = p + aggregate(q, s_up_ref[num_h_layers])
    q = q + aggregate(p, s_dn_ref[num_h_layers])

    # Output linear, emitted lane-dense as (C, Np).
    out_ref[...] = (jnp.dot(w_out_ref[...], q, preferred_element_type=f32)
                    + b_out_ref[...])


def _make_streamed_kernel(tile_n: int, n_tiles: int):
    """AT lives in HBM; (Np, tile_n) destination-column tiles are streamed
    through a manual 2-deep double buffer.  p/q stay resident in VMEM."""

    def kernel(xT_ref, aT_hbm, wp_ref, wq_ref, s_up_ref, s_dn_ref,
               a_up_ref, a_dn_ref, w_out_ref, b_out_ref, out_ref,
               p_ref, q_ref, at_buf, sem):
        f32, bf16 = jnp.float32, jnp.bfloat16
        num_h_layers = a_up_ref.shape[0]

        xT = xT_ref[...]
        p_ref[...] = jnp.dot(wp_ref[...], xT, preferred_element_type=f32)
        q_ref[...] = jnp.dot(wq_ref[...], xT, preferred_element_type=f32)

        def fetch(t):
            slot = t % 2
            pltpu.make_async_copy(
                aT_hbm.at[:, pl.ds(t * tile_n, tile_n)],
                at_buf.at[slot], sem.at[slot]).start()

        def wait(t):
            slot = t % 2
            pltpu.make_async_copy(
                aT_hbm.at[:, pl.ds(t * tile_n, tile_n)],
                at_buf.at[slot], sem.at[slot]).wait()

        def aggregate_into(dst_ref, src_ref, S_bf16):
            # dst[:, :] += (S @ src) @ AT, one (Np, tile_n) AT tile at a time.
            msg = jnp.dot(S_bf16, src_ref[...].astype(bf16),
                          preferred_element_type=f32).astype(bf16)   # (H, Np)
            fetch(0)
            # Static unroll: all DMA windows and column offsets are static, so
            # no dynamic lane-dim slicing is needed.  n_tiles is small for any
            # AT that warrants streaming on current VMEM sizes.
            # TODO(synk): for very large graphs switch to a fori_loop body with
            # aligned dynamic column offsets to bound code size.
            for t in range(n_tiles):
                wait(t)
                if t + 1 < n_tiles:
                    fetch(t + 1)                    # prefetch next tile
                cols = slice(t * tile_n, (t + 1) * tile_n)
                dst_ref[:, cols] = dst_ref[:, cols] + jnp.dot(
                    msg, at_buf[t % 2], preferred_element_type=f32)

        for l in range(num_h_layers):
            aggregate_into(p_ref, q_ref, s_up_ref[l])      # up
            aggregate_into(q_ref, p_ref, s_dn_ref[l])      # down
            p_ref[...] = p_ref[...] + a_up_ref[l] * _sigmoid(q_ref[...])
            q_ref[...] = q_ref[...] + a_dn_ref[l] * _sigmoid(p_ref[...])

        aggregate_into(p_ref, q_ref, s_up_ref[num_h_layers])
        aggregate_into(q_ref, p_ref, s_dn_ref[num_h_layers])

        out_ref[...] = (jnp.dot(w_out_ref[...], q_ref[...],
                                preferred_element_type=f32) + b_out_ref[...])

    return kernel


# ---------------------------------------------------------------------------
# Wrapper
# ---------------------------------------------------------------------------

def _vmem_capacity_bytes():
    """Generation-aware VMEM capacity (v5e/v6e 128 MiB, v7x 64 MiB per core)."""
    try:
        return int(pltpu.get_tpu_info().vmem_capacity_bytes)
    except Exception:
        return 64 << 20                     # conservative fallback


def build_adj_t(edge_index, num_nodes, pad_to=None):
    """Dense transposed adjacency AT[src, dst] = #edges(src->dst), bf16,
    zero-padded along both axes up to a multiple of 128 lanes.

    Built ONCE and reused across forward calls.  Sum aggregation of source
    features at each destination equals `msg @ AT` in the (H, N) layout.
    0/1 (and small integer) edge multiplicities are exact in bf16.
    """
    n = num_nodes if pad_to is None else max(int(pad_to), num_nodes)
    n_pad = -(-n // 128) * 128
    src, dst = edge_index[0], edge_index[1]
    at = jnp.zeros((n_pad, n_pad), jnp.float32).at[src, dst].add(1.0)
    return at.astype(jnp.bfloat16)


def sgnn_forward(x, adj_t, params, *, at_tile=512, stream_at=None):
    """x: (N, F) float32; adj_t: (N_pad, N_pad) bf16 from build_adj_t."""
    N, F = x.shape
    N_pad = adj_t.shape[0]
    assert adj_t.shape == (N_pad, N_pad) and N_pad % 128 == 0 and N_pad >= N

    H = params["w_p"].shape[0]
    C = params["w_out"].shape[0]
    L_h = params["a_up"].shape[0]

    # Lane-pad the node axis (exact: padded AT rows/cols are zero; output sliced).
    xT = jnp.zeros((F, N_pad), jnp.float32).at[:, :N].set(
        jnp.asarray(x, jnp.float32).T)

    # Pre-cast the symmetric MXU operands once (f32 accumulation in-kernel).
    s_up = params["s_up"].astype(jnp.bfloat16)
    s_dn = params["s_dn"].astype(jnp.bfloat16)

    inputs = (xT, adj_t, params["w_p"], params["w_q"], s_up, s_dn,
              params["a_up"], params["a_dn"], params["w_out"], params["b_out"])

    small_bytes = sum(int(a.size) * a.dtype.itemsize
                      for a in inputs if a is not adj_t)
    at_bytes = int(adj_t.size) * adj_t.dtype.itemsize
    out_bytes = C * N_pad * 4
    pq_bytes = 2 * H * N_pad * 4

    budget = _vmem_capacity_bytes() - (8 << 20)     # small headroom

    resident_need = small_bytes + at_bytes + out_bytes + pq_bytes + (2 << 20)
    if stream_at is None:
        stream_at = resident_need > budget

    n_pass = 2 * (L_h + 1)
    flops = int(4 * H * F * N_pad
                + n_pass * (2 * H * H * N_pad + 2 * H * N_pad * N_pad)
                + 2 * C * H * N_pad)
    transcendentals = int(4 * L_h * H * N_pad)

    vmem_spec = pl.BlockSpec(memory_space=pltpu.MemorySpace.VMEM)

    if not stream_at:
        vmem_limit = int(min(budget, max(32 << 20, resident_need + (8 << 20))))
        cost = pl.CostEstimate(flops=flops, transcendentals=transcendentals,
                               bytes_accessed=small_bytes + at_bytes + out_bytes)
        out_t = pl.pallas_call(
            _sgnn_kernel_resident,
            out_shape=jax.ShapeDtypeStruct((C, N_pad), jnp.float32),
            in_specs=[vmem_spec] * len(inputs),
            out_specs=vmem_spec,
            compiler_params=pltpu.CompilerParams(vmem_limit_bytes=vmem_limit),
            cost_estimate=cost,
        )(*inputs)
    else:
        tile = max(128, min(int(at_tile), N_pad))
        tile -= tile % 128
        while N_pad % tile != 0:                 # 128 always divides N_pad
            tile -= 128
        n_tiles = N_pad // tile

        buf_bytes = 2 * N_pad * tile * 2         # bf16 double buffer
        stream_need = small_bytes + out_bytes + pq_bytes + buf_bytes + (2 << 20)
        vmem_limit = int(min(budget, max(32 << 20, stream_need + (8 << 20))))
        cost = pl.CostEstimate(flops=flops, transcendentals=transcendentals,
                               bytes_accessed=small_bytes + out_bytes
                               + n_pass * at_bytes)

        in_specs = ([vmem_spec, pl.BlockSpec(memory_space=pl.ANY)]
                    + [vmem_spec] * (len(inputs) - 2))
        out_t = pl.pallas_call(
            _make_streamed_kernel(tile, n_tiles),
            out_shape=jax.ShapeDtypeStruct((C, N_pad), jnp.float32),
            in_specs=in_specs,
            out_specs=vmem_spec,
            scratch_shapes=[
                pltpu.VMEM((H, N_pad), jnp.float32),            # p
                pltpu.VMEM((H, N_pad), jnp.float32),            # q
                pltpu.VMEM((2, N_pad, tile), jnp.bfloat16),     # AT double buffer
                pltpu.SemaphoreType.DMA((2,)),
            ],
            compiler_params=pltpu.CompilerParams(vmem_limit_bytes=vmem_limit),
            cost_estimate=cost,
        )(*inputs)

    return out_t[:, :N].T                        # (N, C)


# ---------------------------------------------------------------------------
# Parameters & pure-JAX reference
# ---------------------------------------------------------------------------

def init_params(key, num_features, hidden, num_classes, num_h_layers):
    ks = jax.random.split(key, 8)

    def lin_w(k, fan_in, fan_out):
        # PyTorch Linear default init, stored (out, in) for y = W @ x^T.
        bound = 1.0 / float(fan_in) ** 0.5
        return jax.random.uniform(k, (fan_out, fan_in), jnp.float32, -bound, bound)

    L = num_h_layers + 1
    s_up_raw = jax.random.uniform(ks[2], (L, hidden, hidden), jnp.float32, -0.1, 0.1)
    s_dn_raw = jax.random.uniform(ks[3], (L, hidden, hidden), jnp.float32, -0.1, 0.1)
    b_bound = 1.0 / float(hidden) ** 0.5
    return {
        "w_p": lin_w(ks[0], num_features, hidden),            # (H, F)
        "w_q": lin_w(ks[1], num_features, hidden),            # (H, F)
        # symmetric S, as in LA-SympNet linear modules
        "s_up": 0.5 * (s_up_raw + jnp.swapaxes(s_up_raw, -1, -2)),
        "s_dn": 0.5 * (s_dn_raw + jnp.swapaxes(s_dn_raw, -1, -2)),
        "a_up": jax.random.uniform(ks[4], (num_h_layers, hidden, 1),
                                   jnp.float32, -0.1, 0.1),
        "a_dn": jax.random.uniform(ks[5], (num_h_layers, hidden, 1),
                                   jnp.float32, -0.1, 0.1),
        "w_out": lin_w(ks[6], hidden, num_classes),           # (C, H)
        "b_out": jax.random.uniform(ks[7], (num_classes, 1), jnp.float32,
                                    -b_bound, b_bound),
    }


def sgnn_reference(x, edge_index, params):
    """Pure-JAX f32 reference in the original (N, H) layout."""
    N = x.shape[0]
    src, dst = edge_index[0], edge_index[1]
    A = jnp.zeros((N, N), jnp.float32).at[dst, src].add(1.0)
    p = x @ params["w_p"].T
    q = x @ params["w_q"].T
    L_h = params["a_up"].shape[0]
    for l in range(L_h):
        p = p + A @ (q @ params["s_up"][l])
        q = q + A @ (p @ params["s_dn"][l])
        p = p + params["a_up"][l].T * jax.nn.sigmoid(q)
        q = q + params["a_dn"][l].T * jax.nn.sigmoid(p)
    p = p + A @ (q @ params["s_up"][L_h])
    q = q + A @ (p @ params["s_dn"][L_h])
    return q @ params["w_out"].T + params["b_out"].T


# ---------------------------------------------------------------------------
# Demo / validation
# ---------------------------------------------------------------------------

if __name__ == "__main__":
    # opt = dict(num_features=8, hidden=32, num_classes=4, num_h_layers=2,
    #            input_dropout=0.)
    N, F, H, C, NHL = 64, 8, 32, 4, 2

    key = jax.random.PRNGKey(0)
    k_x, k_p = jax.random.split(key)
    x = jax.random.normal(k_x, (N, F), jnp.float32)

    # deterministic ring graph (bidirectional): edge_index = [src; dst]
    idx = jnp.arange(N, dtype=jnp.int32)
    src = jnp.concatenate([idx, (idx + 1) % N])
    dst = jnp.concatenate([(idx + 1) % N, idx])
    edge_index = jnp.stack([src, dst], axis=0)

    params = init_params(k_p, F, H, C, NHL)
    ref = sgnn_reference(x, edge_index, params)
    tol = 5e-2 * max(1.0, float(jnp.max(jnp.abs(ref))))

    # (1) VMEM-resident path: N padded 64 -> 128 lanes, AT resident.
    adj_t = build_adj_t(edge_index, N)           # built once, reused
    out = sgnn_forward(x, adj_t, params)
    jax.block_until_ready(out)
    assert out.shape == (N, C) and out.dtype == jnp.float32
    err = float(jnp.max(jnp.abs(out - ref)))
    assert err < tol, f"resident: max |kernel - ref| = {err} (tol {tol})"

    # (2) HBM-streamed-AT path (forced; padded to 256 with 128-wide tiles so
    #     the double buffer actually cycles).  Selected automatically when the
    #     dense AT no longer fits the chip's VMEM budget.
    adj_t2 = build_adj_t(edge_index, N, pad_to=256)
    out2 = sgnn_forward(x, adj_t2, params, stream_at=True, at_tile=128)
    jax.block_until_ready(out2)
    assert out2.shape == (N, C)
    err2 = float(jnp.max(jnp.abs(out2 - ref)))
    assert err2 < tol, f"streamed: max |kernel - ref| = {err2} (tol {tol})"

    print("KERNEL_OK")
</pallas_src>

<mosaic_0001>
module attributes {stable_mosaic.version = 11 : i64} {
  func.func @_sgnn_kernel_resident(%arg0: memref<8x128xf32, #tpu.memory_space<vmem>>, %arg1: memref<128x128xbf16, #tpu.memory_space<vmem>>, %arg2: memref<32x8xf32, #tpu.memory_space<vmem>>, %arg3: memref<32x8xf32, #tpu.memory_space<vmem>>, %arg4: memref<3x32x32xbf16, #tpu.memory_space<vmem>>, %arg5: memref<3x32x32xbf16, #tpu.memory_space<vmem>>, %arg6: memref<2x32x1xf32, #tpu.memory_space<vmem>>, %arg7: memref<2x32x1xf32, #tpu.memory_space<vmem>>, %arg8: memref<4x32xf32, #tpu.memory_space<vmem>>, %arg9: memref<4x1xf32, #tpu.memory_space<vmem>>, %arg10: memref<4x128xf32, #tpu.memory_space<vmem>>) attributes {dimension_semantics = [], scalar_prefetch = 0 : i64, scratch_operands = 0 : i64, tpu.core_type = #tpu.core_type<tc>} {
    %c0 = arith.constant 0 : index
    %c0_0 = arith.constant 0 : index
    %0 = vector.load %arg0[%c0, %c0_0] : memref<8x128xf32, #tpu.memory_space<vmem>>, vector<8x128xf32>
    %c0_1 = arith.constant 0 : index
    %c0_2 = arith.constant 0 : index
    %1 = vector.load %arg1[%c0_1, %c0_2] : memref<128x128xbf16, #tpu.memory_space<vmem>>, vector<128x128xbf16>
    %c0_3 = arith.constant 0 : index
    %c0_4 = arith.constant 0 : index
    %2 = vector.load %arg2[%c0_3, %c0_4] : memref<32x8xf32, #tpu.memory_space<vmem>>, vector<32x8xf32>
    %cst = arith.constant dense<0.000000e+00> : vector<32x128xf32>
    %3 = tpu.matmul %2, %0, %cst {dimension_numbers = #tpu.dot_dimension_numbers<[1], [0], [0], [1], [0, 0, 1, 1], [], []>} : vector<32x8xf32>, vector<8x128xf32>, vector<32x128xf32> -> vector<32x128xf32>
    %c0_5 = arith.constant 0 : index
    %c0_6 = arith.constant 0 : index
    %4 = vector.load %arg3[%c0_5, %c0_6] : memref<32x8xf32, #tpu.memory_space<vmem>>, vector<32x8xf32>
    %cst_7 = arith.constant dense<0.000000e+00> : vector<32x128xf32>
    %5 = tpu.matmul %4, %0, %cst_7 {dimension_numbers = #tpu.dot_dimension_numbers<[1], [0], [0], [1], [0, 0, 1, 1], [], []>} : vector<32x8xf32>, vector<8x128xf32>, vector<32x128xf32> -> vector<32x128xf32>
    %c0_8 = arith.constant 0 : index
    %c0_9 = arith.constant 0 : index
    %c0_10 = arith.constant 0 : index
    %6 = vector.load %arg4[%c0_8, %c0_9, %c0_10] : memref<3x32x32xbf16, #tpu.memory_space<vmem>>, vector<1x32x32xbf16>
    %7 = vector.shape_cast %6 : vector<1x32x32xbf16> to vector<32x32xbf16>
    %8 = arith.truncf %5 : vector<32x128xf32> to vector<32x128xbf16>
    %cst_11 = arith.constant dense<0.000000e+00> : vector<32x128xf32>
    %9 = tpu.matmul %7, %8, %cst_11 {dimension_numbers = #tpu.dot_dimension_numbers<[1], [0], [0], [1], [0, 0, 1, 1], [], []>} : vector<32x32xbf16>, vector<32x128xbf16>, vector<32x128xf32> -> vector<32x128xf32>
    %10 = arith.truncf %9 : vector<32x128xf32> to vector<32x128xbf16>
    %cst_12 = arith.constant dense<0.000000e+00> : vector<32x128xf32>
    %11 = tpu.matmul %10, %1, %cst_12 {dimension_numbers = #tpu.dot_dimension_numbers<[1], [0], [0], [1], [0, 0, 1, 1], [], []>} : vector<32x128xbf16>, vector<128x128xbf16>, vector<32x128xf32> -> vector<32x128xf32>
    %12 = arith.addf %3, %11 : vector<32x128xf32>
    %c0_13 = arith.constant 0 : index
    %c0_14 = arith.constant 0 : index
    %c0_15 = arith.constant 0 : index
    %13 = vector.load %arg5[%c0_13, %c0_14, %c0_15] : memref<3x32x32xbf16, #tpu.memory_space<vmem>>, vector<1x32x32xbf16>
    %14 = vector.shape_cast %13 : vector<1x32x32xbf16> to vector<32x32xbf16>
    %15 = arith.truncf %12 : vector<32x128xf32> to vector<32x128xbf16>
    %cst_16 = arith.constant dense<0.000000e+00> : vector<32x128xf32>
    %16 = tpu.matmul %14, %15, %cst_16 {dimension_numbers = #tpu.dot_dimension_numbers<[1], [0], [0], [1], [0, 0, 1, 1], [], []>} : vector<32x32xbf16>, vector<32x128xbf16>, vector<32x128xf32> -> vector<32x128xf32>
    %17 = arith.truncf %16 : vector<32x128xf32> to vector<32x128xbf16>
    %cst_17 = arith.constant dense<0.000000e+00> : vector<32x128xf32>
    %18 = tpu.matmul %17, %1, %cst_17 {dimension_numbers = #tpu.dot_dimension_numbers<[1], [0], [0], [1], [0, 0, 1, 1], [], []>} : vector<32x128xbf16>, vector<128x128xbf16>, vector<32x128xf32> -> vector<32x128xf32>
    %19 = arith.addf %5, %18 : vector<32x128xf32>
    %c0_18 = arith.constant 0 : index
    %c0_19 = arith.constant 0 : index
    %c0_20 = arith.constant 0 : index
    %20 = vector.load %arg6[%c0_18, %c0_19, %c0_20] : memref<2x32x1xf32, #tpu.memory_space<vmem>>, vector<1x32x1xf32>
    %21 = vector.shape_cast %20 : vector<1x32x1xf32> to vector<32x1xf32>
    %cst_21 = arith.constant 0.000000e+00 : f32
    %22 = vector.broadcast %cst_21 : f32 to vector<32x128xf32>
    %23 = arith.subf %22, %19 : vector<32x128xf32>
    %24 = math.exp %23 : vector<32x128xf32>
    %cst_22 = arith.constant 1.000000e+00 : f32
    %25 = vector.broadcast %cst_22 : f32 to vector<32x128xf32>
    %26 = arith.addf %25, %24 : vector<32x128xf32>
    %27 = tpu.reciprocal %26 {approx = true} : vector<32x128xf32> -> vector<32x128xf32>
    %28 = vector.broadcast %21 : vector<32x1xf32> to vector<32x128xf32>
    %29 = arith.mulf %28, %27 : vector<32x128xf32>
    %30 = arith.addf %12, %29 : vector<32x128xf32>
    %c0_23 = arith.constant 0 : index
    %c0_24 = arith.constant 0 : index
    %c0_25 = arith.constant 0 : index
    %31 = vector.load %arg7[%c0_23, %c0_24, %c0_25] : memref<2x32x1xf32, #tpu.memory_space<vmem>>, vector<1x32x1xf32>
    %32 = vector.shape_cast %31 : vector<1x32x1xf32> to vector<32x1xf32>
    %cst_26 = arith.constant 0.000000e+00 : f32
    %33 = vector.broadcast %cst_26 : f32 to vector<32x128xf32>
    %34 = arith.subf %33, %30 : vector<32x128xf32>
    %35 = math.exp %34 : vector<32x128xf32>
    %cst_27 = arith.constant 1.000000e+00 : f32
    %36 = vector.broadcast %cst_27 : f32 to vector<32x128xf32>
    %37 = arith.addf %36, %35 : vector<32x128xf32>
    %38 = tpu.reciprocal %37 {approx = true} : vector<32x128xf32> -> vector<32x128xf32>
    %39 = vector.broadcast %32 : vector<32x1xf32> to vector<32x128xf32>
    %40 = arith.mulf %39, %38 : vector<32x128xf32>
    %41 = arith.addf %19, %40 : vector<32x128xf32>
    %c1 = arith.constant 1 : index
    %c0_28 = arith.constant 0 : index
    %c0_29 = arith.constant 0 : index
    %42 = vector.load %arg4[%c1, %c0_28, %c0_29] : memref<3x32x32xbf16, #tpu.memory_space<vmem>>, vector<1x32x32xbf16>
    %43 = vector.shape_cast %42 : vector<1x32x32xbf16> to vector<32x32xbf16>
    %44 = arith.truncf %41 : vector<32x128xf32> to vector<32x128xbf16>
    %cst_30 = arith.constant dense<0.000000e+00> : vector<32x128xf32>
    %45 = tpu.matmul %43, %44, %cst_30 {dimension_numbers = #tpu.dot_dimension_numbers<[1], [0], [0], [1], [0, 0, 1, 1], [], []>} : vector<32x32xbf16>, vector<32x128xbf16>, vector<32x128xf32> -> vector<32x128xf32>
    %46 = arith.truncf %45 : vector<32x128xf32> to vector<32x128xbf16>
    %cst_31 = arith.constant dense<0.000000e+00> : vector<32x128xf32>
    %47 = tpu.matmul %46, %1, %cst_31 {dimension_numbers = #tpu.dot_dimension_numbers<[1], [0], [0], [1], [0, 0, 1, 1], [], []>} : vector<32x128xbf16>, vector<128x128xbf16>, vector<32x128xf32> -> vector<32x128xf32>
    %48 = arith.addf %30, %47 : vector<32x128xf32>
    %c1_32 = arith.constant 1 : index
    %c0_33 = arith.constant 0 : index
    %c0_34 = arith.constant 0 : index
    %49 = vector.load %arg5[%c1_32, %c0_33, %c0_34] : memref<3x32x32xbf16, #tpu.memory_space<vmem>>, vector<1x32x32xbf16>
    %50 = vector.shape_cast %49 : vector<1x32x32xbf16> to vector<32x32xbf16>
    %51 = arith.truncf %48 : vector<32x128xf32> to vector<32x128xbf16>
    %cst_35 = arith.constant dense<0.000000e+00> : vector<32x128xf32>
    %52 = tpu.matmul %50, %51, %cst_35 {dimension_numbers = #tpu.dot_dimension_numbers<[1], [0], [0], [1], [0, 0, 1, 1], [], []>} : vector<32x32xbf16>, vector<32x128xbf16>, vector<32x128xf32> -> vector<32x128xf32>
    %53 = arith.truncf %52 : vector<32x128xf32> to vector<32x128xbf16>
    %cst_36 = arith.constant dense<0.000000e+00> : vector<32x128xf32>
    %54 = tpu.matmul %53, %1, %cst_36 {dimension_numbers = #tpu.dot_dimension_numbers<[1], [0], [0], [1], [0, 0, 1, 1], [], []>} : vector<32x128xbf16>, vector<128x128xbf16>, vector<32x128xf32> -> vector<32x128xf32>
    %55 = arith.addf %41, %54 : vector<32x128xf32>
    %c1_37 = arith.constant 1 : index
    %c0_38 = arith.constant 0 : index
    %c0_39 = arith.constant 0 : index
    %56 = vector.load %arg6[%c1_37, %c0_38, %c0_39] : memref<2x32x1xf32, #tpu.memory_space<vmem>>, vector<1x32x1xf32>
    %57 = vector.shape_cast %56 : vector<1x32x1xf32> to vector<32x1xf32>
    %cst_40 = arith.constant 0.000000e+00 : f32
    %58 = vector.broadcast %cst_40 : f32 to vector<32x128xf32>
    %59 = arith.subf %58, %55 : vector<32x128xf32>
    %60 = math.exp %59 : vector<32x128xf32>
    %cst_41 = arith.constant 1.000000e+00 : f32
    %61 = vector.broadcast %cst_41 : f32 to vector<32x128xf32>
    %62 = arith.addf %61, %60 : vector<32x128xf32>
    %63 = tpu.reciprocal %62 {approx = true} : vector<32x128xf32> -> vector<32x128xf32>
    %64 = vector.broadcast %57 : vector<32x1xf32> to vector<32x128xf32>
    %65 = arith.mulf %64, %63 : vector<32x128xf32>
    %66 = arith.addf %48, %65 : vector<32x128xf32>
    %c1_42 = arith.constant 1 : index
    %c0_43 = arith.constant 0 : index
    %c0_44 = arith.constant 0 : index
    %67 = vector.load %arg7[%c1_42, %c0_43, %c0_44] : memref<2x32x1xf32, #tpu.memory_space<vmem>>, vector<1x32x1xf32>
    %68 = vector.shape_cast %67 : vector<1x32x1xf32> to vector<32x1xf32>
    %cst_45 = arith.constant 0.000000e+00 : f32
    %69 = vector.broadcast %cst_45 : f32 to vector<32x128xf32>
    %70 = arith.subf %69, %66 : vector<32x128xf32>
    %71 = math.exp %70 : vector<32x128xf32>
    %cst_46 = arith.constant 1.000000e+00 : f32
    %72 = vector.broadcast %cst_46 : f32 to vector<32x128xf32>
    %73 = arith.addf %72, %71 : vector<32x128xf32>
    %74 = tpu.reciprocal %73 {approx = true} : vector<32x128xf32> -> vector<32x128xf32>
    %75 = vector.broadcast %68 : vector<32x1xf32> to vector<32x128xf32>
    %76 = arith.mulf %75, %74 : vector<32x128xf32>
    %77 = arith.addf %55, %76 : vector<32x128xf32>
    %c2 = arith.constant 2 : index
    %c0_47 = arith.constant 0 : index
    %c0_48 = arith.constant 0 : index
    %78 = vector.load %arg4[%c2, %c0_47, %c0_48] : memref<3x32x32xbf16, #tpu.memory_space<vmem>>, vector<1x32x32xbf16>
    %79 = vector.shape_cast %78 : vector<1x32x32xbf16> to vector<32x32xbf16>
    %80 = arith.truncf %77 : vector<32x128xf32> to vector<32x128xbf16>
    %cst_49 = arith.constant dense<0.000000e+00> : vector<32x128xf32>
    %81 = tpu.matmul %79, %80, %cst_49 {dimension_numbers = #tpu.dot_dimension_numbers<[1], [0], [0], [1], [0, 0, 1, 1], [], []>} : vector<32x32xbf16>, vector<32x128xbf16>, vector<32x128xf32> -> vector<32x128xf32>
    %82 = arith.truncf %81 : vector<32x128xf32> to vector<32x128xbf16>
    %cst_50 = arith.constant dense<0.000000e+00> : vector<32x128xf32>
    %83 = tpu.matmul %82, %1, %cst_50 {dimension_numbers = #tpu.dot_dimension_numbers<[1], [0], [0], [1], [0, 0, 1, 1], [], []>} : vector<32x128xbf16>, vector<128x128xbf16>, vector<32x128xf32> -> vector<32x128xf32>
    %84 = arith.addf %66, %83 : vector<32x128xf32>
    %c2_51 = arith.constant 2 : index
    %c0_52 = arith.constant 0 : index
    %c0_53 = arith.constant 0 : index
    %85 = vector.load %arg5[%c2_51, %c0_52, %c0_53] : memref<3x32x32xbf16, #tpu.memory_space<vmem>>, vector<1x32x32xbf16>
    %86 = vector.shape_cast %85 : vector<1x32x32xbf16> to vector<32x32xbf16>
    %87 = arith.truncf %84 : vector<32x128xf32> to vector<32x128xbf16>
    %cst_54 = arith.constant dense<0.000000e+00> : vector<32x128xf32>
    %88 = tpu.matmul %86, %87, %cst_54 {dimension_numbers = #tpu.dot_dimension_numbers<[1], [0], [0], [1], [0, 0, 1, 1], [], []>} : vector<32x32xbf16>, vector<32x128xbf16>, vector<32x128xf32> -> vector<32x128xf32>
    %89 = arith.truncf %88 : vector<32x128xf32> to vector<32x128xbf16>
    %cst_55 = arith.constant dense<0.000000e+00> : vector<32x128xf32>
    %90 = tpu.matmul %89, %1, %cst_55 {dimension_numbers = #tpu.dot_dimension_numbers<[1], [0], [0], [1], [0, 0, 1, 1], [], []>} : vector<32x128xbf16>, vector<128x128xbf16>, vector<32x128xf32> -> vector<32x128xf32>
    %91 = arith.addf %77, %90 : vector<32x128xf32>
    %c0_56 = arith.constant 0 : index
    %c0_57 = arith.constant 0 : index
    %92 = vector.load %arg8[%c0_56, %c0_57] : memref<4x32xf32, #tpu.memory_space<vmem>>, vector<4x32xf32>
    %cst_58 = arith.constant dense<0.000000e+00> : vector<4x128xf32>
    %93 = tpu.matmul %92, %91, %cst_58 {dimension_numbers = #tpu.dot_dimension_numbers<[1], [0], [0], [1], [0, 0, 1, 1], [], []>} : vector<4x32xf32>, vector<32x128xf32>, vector<4x128xf32> -> vector<4x128xf32>
    %c0_59 = arith.constant 0 : index
    %c0_60 = arith.constant 0 : index
    %94 = vector.load %arg9[%c0_59, %c0_60] : memref<4x1xf32, #tpu.memory_space<vmem>>, vector<4x1xf32>
    %95 = vector.broadcast %94 : vector<4x1xf32> to vector<4x128xf32>
    %96 = arith.addf %93, %95 : vector<4x128xf32>
    %c0_61 = arith.constant 0 : index
    %c0_62 = arith.constant 0 : index
    %97 = vector.load %arg10[%c0_61, %c0_62] : memref<4x128xf32, #tpu.memory_space<vmem>>, vector<4x128xf32>
    tpu.vector_store %arg10[%c0_61, %c0_62], %96 {strides = array<i32>} : memref<4x128xf32, #tpu.memory_space<vmem>>, vector<4x128xf32>,
    return
  }
}

</mosaic_0001>

<llo_original>
// kernel: tpu_custom_call.1
$region0: #{tpu_custom_call.1}
  #allocation0 [shape = 'u32[]', space=smem, size = 0x4, offset = 0x4, fixed_abs, tag = 'smem constant byte address 0x4 - core index']
  #allocation1 [shape = 'u32[144,128]{1,0:T(1,128)}', space=vmem, size = 0x12000, scoped, tag = 'internal scratch']
  %s0 = inlined_call_operand.vmem [shape: f32[8,128], index: 0, kind: input, shape index: {}]
  %s1 = inlined_call_operand.vmem [shape: bf16[128,128], index: 1, kind: input, shape index: {}]
  %s2 = inlined_call_operand.vmem [shape: f32[32,8], index: 2, kind: input, shape index: {}]
  %s3 = inlined_call_operand.vmem [shape: f32[32,8], index: 3, kind: input, shape index: {}]
  %s4 = inlined_call_operand.vmem [shape: bf16[3,32,32], index: 4, kind: input, shape index: {}]
  %s5 = inlined_call_operand.vmem [shape: bf16[3,32,32], index: 5, kind: input, shape index: {}]
  %s6 = inlined_call_operand.vmem [shape: f32[2,32,1], index: 6, kind: input, shape index: {}]
  %s7 = inlined_call_operand.vmem [shape: f32[2,32,1], index: 7, kind: input, shape index: {}]
  %s8 = inlined_call_operand.vmem [shape: f32[4,32], index: 8, kind: input, shape index: {}]
  %s9 = inlined_call_operand.vmem [shape: f32[4,1], index: 9, kind: input, shape index: {}]
  %s10 = inlined_call_operand.hbm [shape: f32[4,128], index: 10, kind: output, shape index: {}]
  %s11 = sld [smem:[#allocation0]]
  $region50: #{tpu_custom_call.1} parent=0
    _
  %s13 = ssub.s32 1, %s11
  %s14 = scalar_select 0, %s13, %s11
  $region1: #{tpu_custom_call.1} parent=0
    #allocation2 [shape = 'u8[2048]{0}', space=vmem, size = 0x800, scoped, tag = 'output window, operand 0, single buffered']
    #allocation3 [shape = 's32[1]{0}', space=sflag, size = 0x4, scoped, tag = 'scoped memory for tpu_custom_call.1']
    %15 = vsyncpa [#allocation3], 0
    // Predicated region
    $region2: #{tpu_custom_call.1} parent=1 // pred_check
      _
    $region3: #{tpu_custom_call.1} parent=1 // pred_check_branch
      %17 = sbr.rel (0) target = $region5
    $region4: #{tpu_custom_call.1} parent=1 // pred_region
      _
    $region5: #{tpu_custom_call.1} parent=1 // pred_fallthru
      _
    // Predicated region
    $region6: #{tpu_custom_call.1} parent=1 // pred_check
      _
    $region7: #{tpu_custom_call.1} parent=1 // pred_check_branch
      %19 = sbr.rel (0) target = $region9
    $region8: #{tpu_custom_call.1} parent=1 // pred_region
      _
    $region9: #{tpu_custom_call.1} parent=1 // pred_fallthru
      _
    // Predicated region
    $region10: #{tpu_custom_call.1} parent=1 // pred_check
      _
    $region11: #{tpu_custom_call.1} parent=1 // pred_check_branch
      %21 = sbr.rel (0) target = $region13
    $region12: #{tpu_custom_call.1} parent=1 // pred_region
      _
    $region13: #{tpu_custom_call.1} parent=1 // pred_fallthru
      _
    // Predicated region
    $region14: #{tpu_custom_call.1} parent=1 // pred_check
      _
    $region15: #{tpu_custom_call.1} parent=1 // pred_check_branch
      %23 = sbr.rel (0) target = $region17
    $region16: #{tpu_custom_call.1} parent=1 // pred_region
      _
    $region17: #{tpu_custom_call.1} parent=1 // pred_fallthru
      _
    // Predicated region
    $region18: #{tpu_custom_call.1} parent=1 // pred_check
      _
    $region19: #{tpu_custom_call.1} parent=1 // pred_check_branch
      %25 = sbr.rel (0) target = $region21
    $region20: #{tpu_custom_call.1} parent=1 // pred_region
      _
    $region21: #{tpu_custom_call.1} parent=1 // pred_fallthru
      _
    // Predicated region
    $region22: #{tpu_custom_call.1} parent=1 // pred_check
      _
    $region23: #{tpu_custom_call.1} parent=1 // pred_check_branch
      %27 = sbr.rel (0) target = $region25
    $region24: #{tpu_custom_call.1} parent=1 // pred_region
      _
    $region25: #{tpu_custom_call.1} parent=1 // pred_fallthru
      _
    // Predicated region
    $region26: #{tpu_custom_call.1} parent=1 // pred_check
      _
    $region27: #{tpu_custom_call.1} parent=1 // pred_check_branch
      %29 = sbr.rel (0) target = $region29
    $region28: #{tpu_custom_call.1} parent=1 // pred_region
      _
    $region29: #{tpu_custom_call.1} parent=1 // pred_fallthru
      _
    // Predicated region
    $region30: #{tpu_custom_call.1} parent=1 // pred_check
      _
    $region31: #{tpu_custom_call.1} parent=1 // pred_check_branch
      %31 = sbr.rel (0) target = $region33
    $region32: #{tpu_custom_call.1} parent=1 // pred_region
      _
    $region33: #{tpu_custom_call.1} parent=1 // pred_fallthru
      _
    // Predicated region
    $region34: #{tpu_custom_call.1} parent=1 // pred_check
      _
    $region35: #{tpu_custom_call.1} parent=1 // pred_check_branch
      %33 = sbr.rel (0) target = $region37
    $region36: #{tpu_custom_call.1} parent=1 // pred_region
      _
    $region37: #{tpu_custom_call.1} parent=1 // pred_fallthru
      _
    // Predicated region
    $region38: #{tpu_custom_call.1} parent=1 // pred_check
      _
    $region39: #{tpu_custom_call.1} parent=1 // pred_check_branch
      %35 = sbr.rel (0) target = $region41
    $region40: #{tpu_custom_call.1} parent=1 // pred_region
      _
    $region41: #{tpu_custom_call.1} parent=1 // pred_fallthru
      _
    %v37 = vld [vmem:[%s0] sm:$0xff]
    %v38 = vld [vmem:[%s1] sm:$0xf]
    %v39 = vld [vmem:[%s1 + $0x4] sm:$0xf]
    %v40 = vld [vmem:[%s1 + $0x8] sm:$0xf]
    %v41 = vld [vmem:[%s1 + $0xc] sm:$0xf]
    %v42 = vld [vmem:[%s1 + $0x10] sm:$0xf]
    %v43 = vld [vmem:[%s1 + $0x14] sm:$0xf]
    %v44 = vld [vmem:[%s1 + $0x18] sm:$0xf]
    %v45 = vld [vmem:[%s1 + $0x1c] sm:$0xf]
    %v46 = vld [vmem:[%s1 + $0x20] sm:$0xf]
    %v47 = vld [vmem:[%s1 + $0x24] sm:$0xf]
    %v48 = vld [vmem:[%s1 + $0x28] sm:$0xf]
    %v49 = vld [vmem:[%s1 + $0x2c] sm:$0xf]
    %v50 = vld [vmem:[%s1 + $0x30] sm:$0xf]
    %v51 = vld [vmem:[%s1 + $0x34] sm:$0xf]
    %v52 = vld [vmem:[%s1 + $0x38] sm:$0xf]
    %v53 = vld [vmem:[%s1 + $0x3c] sm:$0xf]
    %v54 = vld [vmem:[%s2] sm:$0xff]
    %v55 = vld [vmem:[%s2 + $0x8] sm:$0xff]
    %v56 = vld [vmem:[%s2 + $0x10] sm:$0xff]
    %v57 = vld [vmem:[%s2 + $0x18] sm:$0xff]
    %v58 = vld [vmem:[%s3] sm:$0xff]
    %v59 = vld [vmem:[%s3 + $0x8] sm:$0xff]
    %v60 = vld [vmem:[%s3 + $0x10] sm:$0xff]
    %v61 = vld [vmem:[%s3 + $0x18] sm:$0xff]
    %vm62 = vcmask 64512
    %v64 = vsel %vm62, %v58, 0
    %v67 = vsel %vm62, %v59, 0
    %v70 = vsel %vm62, %v60, 0
    %v73 = vsel %vm62, %v61, 0
    %75 = vmatprep.subr.mxu0 0.0
    %76 = vmatpush1.msra.mxu0 0.0
    %77 = vmatprep.subr.mxu0 0.0
    %78 = vmatpush1.msra.mxu0 0.0
    %79 = vmatprep.subr.mxu0 0.0
    %80 = vmatpush1.msra.mxu0 0.0
    %81 = vmatprep.subr.mxu0 0.0
    %82 = vmatpush1.msra.mxu0 0.0
    %83 = vmatprep.subr.mxu0 0.0
    %84 = vmatpush1.msra.mxu0 0.0
    %85 = vmatprep.subr.mxu0 0.0
    %86 = vmatpush1.msra.mxu0 0.0
    %87 = vmatprep.subr.mxu0 0.0
    %88 = vmatpush1.msra.mxu0 0.0
    %89 = vmatprep.subr.mxu0 0.0
    %90 = vmatpush1.msra.mxu0 0.0
    %91 = vmatprep.subr.mxu0 0.0
    %92 = vmatpush1.msra.mxu0 0.0
    %93 = vmatprep.subr.mxu0 0.0
    %94 = vmatpush1.msra.mxu0 0.0
    %95 = vmatprep.subr.mxu0 0.0
    %96 = vmatpush1.msra.mxu0 0.0
    %97 = vmatprep.subr.mxu0 0.0
    %98 = vmatpush1.msra.mxu0 0.0
    %99 = vmatprep.subr.mxu0 0.0
    %100 = vmatpush1.msra.mxu0 0.0
    %101 = vmatprep.subr.mxu0 0.0
    %102 = vmatpush1.msra.mxu0 0.0
    %103 = vmatprep.subr.mxu0 0.0
    %104 = vmatpush1.msra.mxu0 0.0
    %105 = vmatprep.subr.mxu0 0.0
    %106 = vmatpush1.msra.mxu0 %v37
    %107 = vmatprep.subr.mxu0 0.0
    %108 = vmatpush2.msra.mxu0 0.0
    %109 = vmatprep.subr.mxu0 0.0
    %110 = vmatpush2.msra.mxu0 0.0
    %111 = vmatprep.subr.mxu0 0.0
    %112 = vmatpush2.msra.mxu0 0.0
    %113 = vmatprep.subr.mxu0 0.0
    %114 = vmatpush2.msra.mxu0 0.0
    %115 = vmatprep.subr.mxu0 0.0
    %116 = vmatpush2.msra.mxu0 0.0
    %117 = vmatprep.subr.mxu0 0.0
    %118 = vmatpush2.msra.mxu0 0.0
    %119 = vmatprep.subr.mxu0 0.0
    %120 = vmatpush2.msra.mxu0 0.0
    %121 = vmatprep.subr.mxu0 0.0
    %122 = vmatpush2.msra.mxu0 0.0
    %123 = vmatprep.subr.mxu0 0.0
    %124 = vmatpush2.msra.mxu0 0.0
    %125 = vmatprep.subr.mxu0 0.0
    %126 = vmatpush2.msra.mxu0 0.0
    %127 = vmatprep.subr.mxu0 0.0
    %128 = vmatpush2.msra.mxu0 0.0
    %129 = vmatprep.subr.mxu0 0.0
    %130 = vmatpush2.msra.mxu0 0.0
    %131 = vmatprep.subr.mxu0 0.0
    %132 = vmatpush2.msra.mxu0 0.0
    %133 = vmatprep.subr.mxu0 0.0
    %134 = vmatpush2.msra.mxu0 0.0
    %135 = vmatprep.subr.mxu0 0.0
    %136 = vmatpush2.msra.mxu0 0.0
    %137 = vmatprep.subr.mxu0 0.0
    %138 = vmatpush2.msra.mxu0 0.0
    %139 = vmatprep.mubr.f32.mxu0 0.0
    %140 = vmatmul.mubr.f32.gmra.mxu0 %v64
    %v141 = vpop.f32.mrf.mxu0
    %v142 = vadd.f32 0.0, %v141
    %v143 = vpop.f32.mrf.mxu0
    %144 = vmatprep.mubr.f32.mxu0 0.0
    %145 = vmatmul.mubr.f32.gmra.mxu0 %v67
    %v146 = vpop.f32.mrf.mxu0
    %v147 = vadd.f32 0.0, %v146
    %v148 = vpop.f32.mrf.mxu0
    %149 = vmatprep.mubr.f32.mxu0 0.0
    %150 = vmatmul.mubr.f32.gmra.mxu0 %v70
    %v151 = vpop.f32.mrf.mxu0
    %v152 = vadd.f32 0.0, %v151
    %v153 = vpop.f32.mrf.mxu0
    %154 = vmatprep.mubr.f32.mxu0 0.0
    %155 = vmatmul.mubr.f32.gmra.mxu0 %v73
    %v156 = vpop.f32.mrf.mxu0
    %v157 = vadd.f32 0.0, %v156
    %v158 = vpop.f32.mrf.mxu0
    %159 = vdwg.mxu0
    %v160 = vld [vmem:[%s4] sm:$0xf]
    %v161 = vld [vmem:[%s4 + $0x4] sm:$0xf]
    %v162 = vld [vmem:[%s4 + $0x8] sm:$0xf]
    %v163 = vld [vmem:[%s4 + $0xc] sm:$0xf]
    %v164 = vpack.c.bf16 %v147, %v142
    %v165 = vpack.c.bf16 %v157, %v152
    %v170 = vunpack.c.l.b16 %v160
    %v171 = vunpack.c.l.b16 %v161
    %v172 = vunpack.c.l.b16 %v162
    %v173 = vunpack.c.l.b16 %v163
    %v174 = vpack.c.b16 %v171, %v170
    %v175 = vpack.c.b16 %v173, %v172
    %vm176 = vcmask 261120
    %v178 = vsel %vm176, %v174, 0
    %v181 = vsel %vm176, %v175, 0
    %183 = vmatprep.subr.bf16.mxu0 0
    %184 = vmatpush1.bf16.msra.mxu0 0
    %185 = vmatprep.subr.bf16.mxu0 0
    %186 = vmatpush1.bf16.msra.mxu0 0
    %187 = vmatprep.subr.bf16.mxu0 0
    %188 = vmatpush1.bf16.msra.mxu0 0
    %189 = vmatprep.subr.bf16.mxu0 0
    %190 = vmatpush1.bf16.msra.mxu0 0
    %191 = vmatprep.subr.bf16.mxu0 0
    %192 = vmatpush1.bf16.msra.mxu0 0
    %193 = vmatprep.subr.bf16.mxu0 0
    %194 = vmatpush1.bf16.msra.mxu0 0
    %195 = vmatprep.subr.bf16.mxu0 0
    %196 = vmatpush1.bf16.msra.mxu0 %v165
    %197 = vmatprep.subr.bf16.mxu0 0
    %198 = vmatpush1.bf16.msra.mxu0 %v164
    %199 = vmatprep.subr.bf16.mxu0 0
    %200 = vmatpush2.bf16.msra.mxu0 0
    %201 = vmatprep.subr.bf16.mxu0 0
    %202 = vmatpush2.bf16.msra.mxu0 0
    %203 = vmatprep.subr.bf16.mxu0 0
    %204 = vmatpush2.bf16.msra.mxu0 0
    %205 = vmatprep.subr.bf16.mxu0 0
    %206 = vmatpush2.bf16.msra.mxu0 0
    %207 = vmatprep.subr.bf16.mxu0 0
    %208 = vmatpush2.bf16.msra.mxu0 0
    %209 = vmatprep.subr.bf16.mxu0 0
    %210 = vmatpush2.bf16.msra.mxu0 0
    %211 = vmatprep.subr.bf16.mxu0 0
    %212 = vmatpush2.bf16.msra.mxu0 0
    %213 = vmatprep.subr.bf16.mxu0 0
    %214 = vmatpush2.bf16.msra.mxu0 0
    %215 = vmatprep.mubr.bf16.mxu0 0
    %216 = vmatmul.mubr.bf16.gmra.mxu0 %v178
    %v217 = vpop.f32.mrf.mxu0
    %v218 = vadd.f32 0.0, %v217
    %v219 = vpop.f32.mrf.mxu0
    %v220 = vpop.f32.mrf.mxu0
    %v221 = vadd.f32 0.0, %v220
    %v222 = vpop.f32.mrf.mxu0
    %223 = vmatprep.mubr.bf16.mxu0 0
    %224 = vmatmul.mubr.bf16.gmra.mxu0 %v181
    %v225 = vpop.f32.mrf.mxu0
    %v226 = vadd.f32 0.0, %v225
    %v227 = vpop.f32.mrf.mxu0
    %v228 = vpop.f32.mrf.mxu0
    %v229 = vadd.f32 0.0, %v228
    %v230 = vpop.f32.mrf.mxu0
    %231 = vdwg.mxu0
    %v232 = vpack.c.bf16 %v221, %v218
    %v233 = vpack.c.bf16 %v229, %v226
    %v250 = vunpack.c.l.b16 %v38
    %v251 = vunpack.c.l.b16 %v39
    %v252 = vunpack.c.l.b16 %v40
    %v253 = vunpack.c.l.b16 %v41
    %v254 = vunpack.c.l.b16 %v42
    %v255 = vunpack.c.l.b16 %v43
    %v256 = vunpack.c.l.b16 %v44
    %v257 = vunpack.c.l.b16 %v45
    %v258 = vunpack.c.l.b16 %v46
    %v259 = vunpack.c.l.b16 %v47
    %v260 = vunpack.c.l.b16 %v48
    %v261 = vunpack.c.l.b16 %v49
    %v262 = vunpack.c.l.b16 %v50
    %v263 = vunpack.c.l.b16 %v51
    %v264 = vunpack.c.l.b16 %v52
    %v265 = vunpack.c.l.b16 %v53
    %v266 = vpack.c.b16 %v251, %v250
    %v267 = vpack.c.b16 %v253, %v252
    %v268 = vpack.c.b16 %v255, %v254
    %v269 = vpack.c.b16 %v257, %v256
    %v270 = vpack.c.b16 %v259, %v258
    %v271 = vpack.c.b16 %v261, %v260
    %v272 = vpack.c.b16 %v263, %v262
    %v273 = vpack.c.b16 %v265, %v264
    %282 = vmatprep.subr.bf16.mxu0 0
    %283 = vmatpush1.bf16.msra.mxu0 %v273
    %284 = vmatprep.subr.bf16.mxu0 0
    %285 = vmatpush1.bf16.msra.mxu0 %v272
    %286 = vmatprep.subr.bf16.mxu0 0
    %287 = vmatpush1.bf16.msra.mxu0 %v271
    %288 = vmatprep.subr.bf16.mxu0 0
    %289 = vmatpush1.bf16.msra.mxu0 %v270
    %290 = vmatprep.subr.bf16.mxu0 0
    %291 = vmatpush1.bf16.msra.mxu0 %v269
    %292 = vmatprep.subr.bf16.mxu0 0
    %293 = vmatpush1.bf16.msra.mxu0 %v268
    %294 = vmatprep.subr.bf16.mxu0 0
    %295 = vmatpush1.bf16.msra.mxu0 %v267
    %296 = vmatprep.subr.bf16.mxu0 0
    %297 = vmatpush1.bf16.msra.mxu0 %v266
    %298 = vmatprep.subr.bf16.mxu0 0
    %299 = vmatpush2.bf16.msra.mxu0 0
    %300 = vmatprep.subr.bf16.mxu0 0
    %301 = vmatpush2.bf16.msra.mxu0 0
    %302 = vmatprep.subr.bf16.mxu0 0
    %303 = vmatpush2.bf16.msra.mxu0 0
    %304 = vmatprep.subr.bf16.mxu0 0
    %305 = vmatpush2.bf16.msra.mxu0 0
    %306 = vmatprep.subr.bf16.mxu0 0
    %307 = vmatpush2.bf16.msra.mxu0 0
    %308 = vmatprep.subr.bf16.mxu0 0
    %309 = vmatpush2.bf16.msra.mxu0 0
    %310 = vmatprep.subr.bf16.mxu0 0
    %311 = vmatpush2.bf16.msra.mxu0 0
    %312 = vmatprep.subr.bf16.mxu0 0
    %313 = vmatpush2.bf16.msra.mxu0 0
    %314 = vmatprep.mubr.bf16.mxu0 0
    %315 = vmatmul.mubr.bf16.gmra.mxu0 %v232
    %v316 = vpop.f32.mrf.mxu0
    %v317 = vadd.f32 0.0, %v316
    %v318 = vpop.f32.mrf.mxu0
    %v319 = vpop.f32.mrf.mxu0
    %v320 = vadd.f32 0.0, %v319
    %v321 = vpop.f32.mrf.mxu0
    %322 = vmatprep.mubr.bf16.mxu0 0
    %323 = vmatmul.mubr.bf16.gmra.mxu0 %v233
    %v324 = vpop.f32.mrf.mxu0
    %v325 = vadd.f32 0.0, %v324
    %v326 = vpop.f32.mrf.mxu0
    %v327 = vpop.f32.mrf.mxu0
    %v328 = vadd.f32 0.0, %v327
    %v329 = vpop.f32.mrf.mxu0
    %330 = vdwg.mxu0
    %v332 = vsel %vm62, %v54, 0
    %v335 = vsel %vm62, %v55, 0
    %v338 = vsel %vm62, %v56, 0
    %v341 = vsel %vm62, %v57, 0
    %343 = vmatprep.subr.mxu0 0.0
    %344 = vmatpush1.msra.mxu0 0.0
    %345 = vmatprep.subr.mxu0 0.0
    %346 = vmatpush1.msra.mxu0 0.0
    %347 = vmatprep.subr.mxu0 0.0
    %348 = vmatpush1.msra.mxu0 0.0
    %349 = vmatprep.subr.mxu0 0.0
    %350 = vmatpush1.msra.mxu0 0.0
    %351 = vmatprep.subr.mxu0 0.0
    %352 = vmatpush1.msra.mxu0 0.0
    %353 = vmatprep.subr.mxu0 0.0
    %354 = vmatpush1.msra.mxu0 0.0
    %355 = vmatprep.subr.mxu0 0.0
    %356 = vmatpush1.msra.mxu0 0.0
    %357 = vmatprep.subr.mxu0 0.0
    %358 = vmatpush1.msra.mxu0 0.0
    %359 = vmatprep.subr.mxu0 0.0
    %360 = vmatpush1.msra.mxu0 0.0
    %361 = vmatprep.subr.mxu0 0.0
    %362 = vmatpush1.msra.mxu0 0.0
    %363 = vmatprep.subr.mxu0 0.0
    %364 = vmatpush1.msra.mxu0 0.0
    %365 = vmatprep.subr.mxu0 0.0
    %366 = vmatpush1.msra.mxu0 0.0
    %367 = vmatprep.subr.mxu0 0.0
    %368 = vmatpush1.msra.mxu0 0.0
    %369 = vmatprep.subr.mxu0 0.0
    %370 = vmatpush1.msra.mxu0 0.0
    %371 = vmatprep.subr.mxu0 0.0
    %372 = vmatpush1.msra.mxu0 0.0
    %373 = vmatprep.subr.mxu0 0.0
    %374 = vmatpush1.msra.mxu0 %v37
    %375 = vmatprep.subr.mxu0 0.0
    %376 = vmatpush2.msra.mxu0 0.0
    %377 = vmatprep.subr.mxu0 0.0
    %378 = vmatpush2.msra.mxu0 0.0
    %379 = vmatprep.subr.mxu0 0.0
    %380 = vmatpush2.msra.mxu0 0.0
    %381 = vmatprep.subr.mxu0 0.0
    %382 = vmatpush2.msra.mxu0 0.0
    %383 = vmatprep.subr.mxu0 0.0
    %384 = vmatpush2.msra.mxu0 0.0
    %385 = vmatprep.subr.mxu0 0.0
    %386 = vmatpush2.msra.mxu0 0.0
    %387 = vmatprep.subr.mxu0 0.0
    %388 = vmatpush2.msra.mxu0 0.0
    %389 = vmatprep.subr.mxu0 0.0
    %390 = vmatpush2.msra.mxu0 0.0
    %391 = vmatprep.subr.mxu0 0.0
    %392 = vmatpush2.msra.mxu0 0.0
    %393 = vmatprep.subr.mxu0 0.0
    %394 = vmatpush2.msra.mxu0 0.0
    %395 = vmatprep.subr.mxu0 0.0
    %396 = vmatpush2.msra.mxu0 0.0
    %397 = vmatprep.subr.mxu0 0.0
    %398 = vmatpush2.msra.mxu0 0.0
    %399 = vmatprep.subr.mxu0 0.0
    %400 = vmatpush2.msra.mxu0 0.0
    %401 = vmatprep.subr.mxu0 0.0
    %402 = vmatpush2.msra.mxu0 0.0
    %403 = vmatprep.subr.mxu0 0.0
    %404 = vmatpush2.msra.mxu0 0.0
    %405 = vmatprep.subr.mxu0 0.0
    %406 = vmatpush2.msra.mxu0 0.0
    %407 = vmatprep.mubr.f32.mxu0 0.0
    %408 = vmatmul.mubr.f32.gmra.mxu0 %v332
    %v409 = vpop.f32.mrf.mxu0
    %v410 = vadd.f32 %v317, %v409
    %v411 = vpop.f32.mrf.mxu0
    %412 = vmatprep.mubr.f32.mxu0 0.0
    %413 = vmatmul.mubr.f32.gmra.mxu0 %v335
    %v414 = vpop.f32.mrf.mxu0
    %v415 = vadd.f32 %v320, %v414
    %v416 = vpop.f32.mrf.mxu0
    %417 = vmatprep.mubr.f32.mxu0 0.0
    %418 = vmatmul.mubr.f32.gmra.mxu0 %v338
    %v419 = vpop.f32.mrf.mxu0
    %v420 = vadd.f32 %v325, %v419
    %v421 = vpop.f32.mrf.mxu0
    %422 = vmatprep.mubr.f32.mxu0 0.0
    %423 = vmatmul.mubr.f32.gmra.mxu0 %v341
    %v424 = vpop.f32.mrf.mxu0
    %v425 = vadd.f32 %v328, %v424
    %v426 = vpop.f32.mrf.mxu0
    %427 = vdwg.mxu0
    %v428 = vld [vmem:[%s5] sm:$0xf]
    %v429 = vld [vmem:[%s5 + $0x4] sm:$0xf]
    %v430 = vld [vmem:[%s5 + $0x8] sm:$0xf]
    %v431 = vld [vmem:[%s5 + $0xc] sm:$0xf]
    %v432 = vpack.c.bf16 %v415, %v410
    %v433 = vpack.c.bf16 %v425, %v420
    %v438 = vunpack.c.l.b16 %v428
    %v439 = vunpack.c.l.b16 %v429
    %v440 = vunpack.c.l.b16 %v430
    %v441 = vunpack.c.l.b16 %v431
    %v442 = vpack.c.b16 %v439, %v438
    %v443 = vpack.c.b16 %v441, %v440
    %v445 = vsel %vm176, %v442, 0
    %v448 = vsel %vm176, %v443, 0
    %450 = vmatprep.subr.bf16.mxu0 0
    %451 = vmatpush1.bf16.msra.mxu0 0
    %452 = vmatprep.subr.bf16.mxu0 0
    %453 = vmatpush1.bf16.msra.mxu0 0
    %454 = vmatprep.subr.bf16.mxu0 0
    %455 = vmatpush1.bf16.msra.mxu0 0
    %456 = vmatprep.subr.bf16.mxu0 0
    %457 = vmatpush1.bf16.msra.mxu0 0
    %458 = vmatprep.subr.bf16.mxu0 0
    %459 = vmatpush1.bf16.msra.mxu0 0
    %460 = vmatprep.subr.bf16.mxu0 0
    %461 = vmatpush1.bf16.msra.mxu0 0
    %462 = vmatprep.subr.bf16.mxu0 0
    %463 = vmatpush1.bf16.msra.mxu0 %v433
    %464 = vmatprep.subr.bf16.mxu0 0
    %465 = vmatpush1.bf16.msra.mxu0 %v432
    %466 = vmatprep.subr.bf16.mxu0 0
    %467 = vmatpush2.bf16.msra.mxu0 0
    %468 = vmatprep.subr.bf16.mxu0 0
    %469 = vmatpush2.bf16.msra.mxu0 0
    %470 = vmatprep.subr.bf16.mxu0 0
    %471 = vmatpush2.bf16.msra.mxu0 0
    %472 = vmatprep.subr.bf16.mxu0 0
    %473 = vmatpush2.bf16.msra.mxu0 0
    %474 = vmatprep.subr.bf16.mxu0 0
    %475 = vmatpush2.bf16.msra.mxu0 0
    %476 = vmatprep.subr.bf16.mxu0 0
    %477 = vmatpush2.bf16.msra.mxu0 0
    %478 = vmatprep.subr.bf16.mxu0 0
    %479 = vmatpush2.bf16.msra.mxu0 0
    %480 = vmatprep.subr.bf16.mxu0 0
    %481 = vmatpush2.bf16.msra.mxu0 0
    %482 = vmatprep.mubr.bf16.mxu0 0
    %483 = vmatmul.mubr.bf16.gmra.mxu0 %v445
    %v484 = vpop.f32.mrf.mxu0
    %v485 = vadd.f32 0.0, %v484
    %v486 = vpop.f32.mrf.mxu0
    %v487 = vpop.f32.mrf.mxu0
    %v488 = vadd.f32 0.0, %v487
    %v489 = vpop.f32.mrf.mxu0
    %490 = vmatprep.mubr.bf16.mxu0 0
    %491 = vmatmul.mubr.bf16.gmra.mxu0 %v448
    %v492 = vpop.f32.mrf.mxu0
    %v493 = vadd.f32 0.0, %v492
    %v494 = vpop.f32.mrf.mxu0
    %v495 = vpop.f32.mrf.mxu0
    %v496 = vadd.f32 0.0, %v495
    %v497 = vpop.f32.mrf.mxu0
    %498 = vdwg.mxu0
    %v499 = vpack.c.bf16 %v488, %v485
    %v500 = vpack.c.bf16 %v496, %v493
    %501 = vmatprep.subr.bf16.mxu0 0
    %502 = vmatpush1.bf16.msra.mxu0 %v273
    %503 = vmatprep.subr.bf16.mxu0 0
    %504 = vmatpush1.bf16.msra.mxu0 %v272
    %505 = vmatprep.subr.bf16.mxu0 0
    %506 = vmatpush1.bf16.msra.mxu0 %v271
    %507 = vmatprep.subr.bf16.mxu0 0
    %508 = vmatpush1.bf16.msra.mxu0 %v270
    %509 = vmatprep.subr.bf16.mxu0 0
    %510 = vmatpush1.bf16.msra.mxu0 %v269
    %511 = vmatprep.subr.bf16.mxu0 0
    %512 = vmatpush1.bf16.msra.mxu0 %v268
    %513 = vmatprep.subr.bf16.mxu0 0
    %514 = vmatpush1.bf16.msra.mxu0 %v267
    %515 = vmatprep.subr.bf16.mxu0 0
    %516 = vmatpush1.bf16.msra.mxu0 %v266
    %517 = vmatprep.subr.bf16.mxu0 0
    %518 = vmatpush2.bf16.msra.mxu0 0
    %519 = vmatprep.subr.bf16.mxu0 0
    %520 = vmatpush2.bf16.msra.mxu0 0
    %521 = vmatprep.subr.bf16.mxu0 0
    %522 = vmatpush2.bf16.msra.mxu0 0
    %523 = vmatprep.subr.bf16.mxu0 0
    %524 = vmatpush2.bf16.msra.mxu0 0
    %525 = vmatprep.subr.bf16.mxu0 0
    %526 = vmatpush2.bf16.msra.mxu0 0
    %527 = vmatprep.subr.bf16.mxu0 0
    %528 = vmatpush2.bf16.msra.mxu0 0
    %529 = vmatprep.subr.bf16.mxu0 0
    %530 = vmatpush2.bf16.msra.mxu0 0
    %531 = vmatprep.subr.bf16.mxu0 0
    %532 = vmatpush2.bf16.msra.mxu0 0
    %533 = vmatprep.mubr.bf16.mxu0 0
    %534 = vmatmul.mubr.bf16.gmra.mxu0 %v499
    %v535 = vpop.f32.mrf.mxu0
    %v536 = vadd.f32 0.0, %v535
    %v537 = vpop.f32.mrf.mxu0
    %v538 = vpop.f32.mrf.mxu0
    %v539 = vadd.f32 0.0, %v538
    %v540 = vpop.f32.mrf.mxu0
    %541 = vmatprep.mubr.bf16.mxu0 0
    %542 = vmatmul.mubr.bf16.gmra.mxu0 %v500
    %v543 = vpop.f32.mrf.mxu0
    %v544 = vadd.f32 0.0, %v543
    %v545 = vpop.f32.mrf.mxu0
    %v546 = vpop.f32.mrf.mxu0
    %v547 = vadd.f32 0.0, %v546
    %v548 = vpop.f32.mrf.mxu0
    %549 = vdwg.mxu0
    %v550 = vadd.f32 %v142, %v536
    %v551 = vadd.f32 %v147, %v539
    %v552 = vadd.f32 %v152, %v544
    %v553 = vadd.f32 %v157, %v547
    %v554 = vld [vmem:[%s6] sm:$0xff]
    %v555 = vld [vmem:[%s6 + $0x8] sm:$0xff]
    %v556 = vld [vmem:[%s6 + $0x10] sm:$0xff]
    %v557 = vld [vmem:[%s6 + $0x18] sm:$0xff]
    %v558 = vsub.f32 0.0, %v550
    %v559 = vsub.f32 0.0, %v551
    %v560 = vsub.f32 0.0, %v552
    %v561 = vsub.f32 0.0, %v553
    %v562 = vmul.f32 %v558, 1.442695
    %v563 = vpow.pop %v562
    %v564 = vmul.f32 %v559, 1.442695
    %v565 = vpow.pop %v564
    %v566 = vmul.f32 %v560, 1.442695
    %v567 = vpow.pop %v566
    %v568 = vmul.f32 %v561, 1.442695
    %v569 = vpow.pop %v568
    %v570 = vadd.f32 %v563, 1.0
    %v571 = vadd.f32 %v565, 1.0
    %v572 = vadd.f32 %v567, 1.0
    %v573 = vadd.f32 %v569, 1.0
    %v574 = vrcp.pop %v570
    %v575 = vrcp.pop %v571
    %v576 = vrcp.pop %v572
    %v577 = vrcp.pop %v573
    %579 = vset.pattern.permute.xlu0 0
    %580 = vperm.xlu0 %579, %v554
    %v581 = vpop.permute.xlu0 %580
    %584 = vset.pattern.permute.xlu0 0
    %585 = vperm.xlu0 %584, %v555
    %v586 = vpop.permute.xlu0 %585
    %589 = vset.pattern.permute.xlu0 0
    %590 = vperm.xlu0 %589, %v556
    %v591 = vpop.permute.xlu0 %590
    %594 = vset.pattern.permute.xlu0 0
    %595 = vperm.xlu0 %594, %v557
    %v596 = vpop.permute.xlu0 %595
    %v598 = vmul.f32 %v581, %v574
    %v599 = vmul.f32 %v586, %v575
    %v600 = vmul.f32 %v591, %v576
    %v601 = vmul.f32 %v596, %v577
    %v602 = vadd.f32 %v410, %v598
    %v603 = vadd.f32 %v415, %v599
    %v604 = vadd.f32 %v420, %v600
    %v605 = vadd.f32 %v425, %v601
    %v606 = vld [vmem:[%s7] sm:$0xff]
    %v607 = vld [vmem:[%s7 + $0x8] sm:$0xff]
    %v608 = vld [vmem:[%s7 + $0x10] sm:$0xff]
    %v609 = vld [vmem:[%s7 + $0x18] sm:$0xff]
    %v610 = vsub.f32 0.0, %v602
    %v611 = vsub.f32 0.0, %v603
    %v612 = vsub.f32 0.0, %v604
    %v613 = vsub.f32 0.0, %v605
    %v614 = vmul.f32 %v610, 1.442695
    %v615 = vpow.pop %v614
    %v616 = vmul.f32 %v611, 1.442695
    %v617 = vpow.pop %v616
    %v618 = vmul.f32 %v612, 1.442695
    %v619 = vpow.pop %v618
    %v620 = vmul.f32 %v613, 1.442695
    %v621 = vpow.pop %v620
    %v622 = vadd.f32 %v615, 1.0
    %v623 = vadd.f32 %v617, 1.0
    %v624 = vadd.f32 %v619, 1.0
    %v625 = vadd.f32 %v621, 1.0
    %v626 = vrcp.pop %v622
    %v627 = vrcp.pop %v623
    %v628 = vrcp.pop %v624
    %v629 = vrcp.pop %v625
    %631 = vset.pattern.permute.xlu0 0
    %632 = vperm.xlu0 %631, %v606
    %v633 = vpop.permute.xlu0 %632
    %636 = vset.pattern.permute.xlu0 0
    %637 = vperm.xlu0 %636, %v607
    %v638 = vpop.permute.xlu0 %637
    %641 = vset.pattern.permute.xlu0 0
    %642 = vperm.xlu0 %641, %v608
    %v643 = vpop.permute.xlu0 %642
    %646 = vset.pattern.permute.xlu0 0
    %647 = vperm.xlu0 %646, %v609
    %v648 = vpop.permute.xlu0 %647
    %v650 = vmul.f32 %v633, %v626
    %v651 = vmul.f32 %v638, %v627
    %v652 = vmul.f32 %v643, %v628
    %v653 = vmul.f32 %v648, %v629
    %v654 = vadd.f32 %v550, %v650
    %v655 = vadd.f32 %v551, %v651
    %v656 = vadd.f32 %v552, %v652
    %v657 = vadd.f32 %v553, %v653
    %s658 = scalar_lea.vmem %s4, 16
    %v659 = vld [vmem:[%s658] sm:$0xf]
    %v660 = vld [vmem:[%s658 + $0x4] sm:$0xf]
    %v661 = vld [vmem:[%s658 + $0x8] sm:$0xf]
    %v662 = vld [vmem:[%s658 + $0xc] sm:$0xf]
    %v663 = vpack.c.bf16 %v655, %v654
    %v664 = vpack.c.bf16 %v657, %v656
    %v669 = vunpack.c.l.b16 %v659
    %v670 = vunpack.c.l.b16 %v660
    %v671 = vunpack.c.l.b16 %v661
    %v672 = vunpack.c.l.b16 %v662
    %v673 = vpack.c.b16 %v670, %v669
    %v674 = vpack.c.b16 %v672, %v671
    %v676 = vsel %vm176, %v673, 0
    %v679 = vsel %vm176, %v674, 0
    %681 = vmatprep.subr.bf16.mxu0 0
    %682 = vmatpush1.bf16.msra.mxu0 0
    %683 = vmatprep.subr.bf16.mxu0 0
    %684 = vmatpush1.bf16.msra.mxu0 0
    %685 = vmatprep.subr.bf16.mxu0 0
    %686 = vmatpush1.bf16.msra.mxu0 0
    %687 = vmatprep.subr.bf16.mxu0 0
    %688 = vmatpush1.bf16.msra.mxu0 0
    %689 = vmatprep.subr.bf16.mxu0 0
    %690 = vmatpush1.bf16.msra.mxu0 0
    %691 = vmatprep.subr.bf16.mxu0 0
    %692 = vmatpush1.bf16.msra.mxu0 0
    %693 = vmatprep.subr.bf16.mxu0 0
    %694 = vmatpush1.bf16.msra.mxu0 %v664
    %695 = vmatprep.subr.bf16.mxu0 0
    %696 = vmatpush1.bf16.msra.mxu0 %v663
    %697 = vmatprep.subr.bf16.mxu0 0
    %698 = vmatpush2.bf16.msra.mxu0 0
    %699 = vmatprep.subr.bf16.mxu0 0
    %700 = vmatpush2.bf16.msra.mxu0 0
    %701 = vmatprep.subr.bf16.mxu0 0
    %702 = vmatpush2.bf16.msra.mxu0 0
    %703 = vmatprep.subr.bf16.mxu0 0
    %704 = vmatpush2.bf16.msra.mxu0 0
    %705 = vmatprep.subr.bf16.mxu0 0
    %706 = vmatpush2.bf16.msra.mxu0 0
    %707 = vmatprep.subr.bf16.mxu0 0
    %708 = vmatpush2.bf16.msra.mxu0 0
    %709 = vmatprep.subr.bf16.mxu0 0
    %710 = vmatpush2.bf16.msra.mxu0 0
    %711 = vmatprep.subr.bf16.mxu0 0
    %712 = vmatpush2.bf16.msra.mxu0 0
    %713 = vmatprep.mubr.bf16.mxu0 0
    %714 = vmatmul.mubr.bf16.gmra.mxu0 %v676
    %v715 = vpop.f32.mrf.mxu0
    %v716 = vadd.f32 0.0, %v715
    %v717 = vpop.f32.mrf.mxu0
    %v718 = vpop.f32.mrf.mxu0
    %v719 = vadd.f32 0.0, %v718
    %v720 = vpop.f32.mrf.mxu0
    %721 = vmatprep.mubr.bf16.mxu0 0
    %722 = vmatmul.mubr.bf16.gmra.mxu0 %v679
    %v723 = vpop.f32.mrf.mxu0
    %v724 = vadd.f32 0.0, %v723
    %v725 = vpop.f32.mrf.mxu0
    %v726 = vpop.f32.mrf.mxu0
    %v727 = vadd.f32 0.0, %v726
    %v728 = vpop.f32.mrf.mxu0
    %729 = vdwg.mxu0
    %v730 = vpack.c.bf16 %v719, %v716
    %v731 = vpack.c.bf16 %v727, %v724
    %732 = vmatprep.subr.bf16.mxu0 0
    %733 = vmatpush1.bf16.msra.mxu0 %v273
    %734 = vmatprep.subr.bf16.mxu0 0
    %735 = vmatpush1.bf16.msra.mxu0 %v272
    %736 = vmatprep.subr.bf16.mxu0 0
    %737 = vmatpush1.bf16.msra.mxu0 %v271
    %738 = vmatprep.subr.bf16.mxu0 0
    %739 = vmatpush1.bf16.msra.mxu0 %v270
    %740 = vmatprep.subr.bf16.mxu0 0
    %741 = vmatpush1.bf16.msra.mxu0 %v269
    %742 = vmatprep.subr.bf16.mxu0 0
    %743 = vmatpush1.bf16.msra.mxu0 %v268
    %744 = vmatprep.subr.bf16.mxu0 0
    %745 = vmatpush1.bf16.msra.mxu0 %v267
    %746 = vmatprep.subr.bf16.mxu0 0
    %747 = vmatpush1.bf16.msra.mxu0 %v266
    %748 = vmatprep.subr.bf16.mxu0 0
    %749 = vmatpush2.bf16.msra.mxu0 0
    %750 = vmatprep.subr.bf16.mxu0 0
    %751 = vmatpush2.bf16.msra.mxu0 0
    %752 = vmatprep.subr.bf16.mxu0 0
    %753 = vmatpush2.bf16.msra.mxu0 0
    %754 = vmatprep.subr.bf16.mxu0 0
    %755 = vmatpush2.bf16.msra.mxu0 0
    %756 = vmatprep.subr.bf16.mxu0 0
    %757 = vmatpush2.bf16.msra.mxu0 0
    %758 = vmatprep.subr.bf16.mxu0 0
    %759 = vmatpush2.bf16.msra.mxu0 0
    %760 = vmatprep.subr.bf16.mxu0 0
    %761 = vmatpush2.bf16.msra.mxu0 0
    %762 = vmatprep.subr.bf16.mxu0 0
    %763 = vmatpush2.bf16.msra.mxu0 0
    %764 = vmatprep.mubr.bf16.mxu0 0
    %765 = vmatmul.mubr.bf16.gmra.mxu0 %v730
    %v766 = vpop.f32.mrf.mxu0
    %v767 = vadd.f32 0.0, %v766
    %v768 = vpop.f32.mrf.mxu0
    %v769 = vpop.f32.mrf.mxu0
    %v770 = vadd.f32 0.0, %v769
    %v771 = vpop.f32.mrf.mxu0
    %772 = vmatprep.mubr.bf16.mxu0 0
    %773 = vmatmul.mubr.bf16.gmra.mxu0 %v731
    %v774 = vpop.f32.mrf.mxu0
    %v775 = vadd.f32 0.0, %v774
    %v776 = vpop.f32.mrf.mxu0
    %v777 = vpop.f32.mrf.mxu0
    %v778 = vadd.f32 0.0, %v777
    %v779 = vpop.f32.mrf.mxu0
    %780 = vdwg.mxu0
    %v781 = vadd.f32 %v602, %v767
    %v782 = vadd.f32 %v603, %v770
    %v783 = vadd.f32 %v604, %v775
    %v784 = vadd.f32 %v605, %v778
    %s785 = scalar_lea.vmem %s5, 16
    %v786 = vld [vmem:[%s785] sm:$0xf]
    %v787 = vld [vmem:[%s785 + $0x4] sm:$0xf]
    %v788 = vld [vmem:[%s785 + $0x8] sm:$0xf]
    %v789 = vld [vmem:[%s785 + $0xc] sm:$0xf]
    %v790 = vpack.c.bf16 %v782, %v781
    %v791 = vpack.c.bf16 %v784, %v783
    %v796 = vunpack.c.l.b16 %v786
    %v797 = vunpack.c.l.b16 %v787
    %v798 = vunpack.c.l.b16 %v788
    %v799 = vunpack.c.l.b16 %v789
    %v800 = vpack.c.b16 %v797, %v796
    %v801 = vpack.c.b16 %v799, %v798
    %v803 = vsel %vm176, %v800, 0
    %v806 = vsel %vm176, %v801, 0
    %808 = vmatprep.subr.bf16.mxu0 0
    %809 = vmatpush1.bf16.msra.mxu0 0
    %810 = vmatprep.subr.bf16.mxu0 0
    %811 = vmatpush1.bf16.msra.mxu0 0
    %812 = vmatprep.subr.bf16.mxu0 0
    %813 = vmatpush1.bf16.msra.mxu0 0
    %814 = vmatprep.subr.bf16.mxu0 0
    %815 = vmatpush1.bf16.msra.mxu0 0
    %816 = vmatprep.subr.bf16.mxu0 0
    %817 = vmatpush1.bf16.msra.mxu0 0
    %818 = vmatprep.subr.bf16.mxu0 0
    %819 = vmatpush1.bf16.msra.mxu0 0
    %820 = vmatprep.subr.bf16.mxu0 0
    %821 = vmatpush1.bf16.msra.mxu0 %v791
    %822 = vmatprep.subr.bf16.mxu0 0
    %823 = vmatpush1.bf16.msra.mxu0 %v790
    %824 = vmatprep.subr.bf16.mxu0 0
    %825 = vmatpush2.bf16.msra.mxu0 0
    %826 = vmatprep.subr.bf16.mxu0 0
    %827 = vmatpush2.bf16.msra.mxu0 0
    %828 = vmatprep.subr.bf16.mxu0 0
    %829 = vmatpush2.bf16.msra.mxu0 0
    %830 = vmatprep.subr.bf16.mxu0 0
    %831 = vmatpush2.bf16.msra.mxu0 0
    %832 = vmatprep.subr.bf16.mxu0 0
    %833 = vmatpush2.bf16.msra.mxu0 0
    %834 = vmatprep.subr.bf16.mxu0 0
    %835 = vmatpush2.bf16.msra.mxu0 0
    %836 = vmatprep.subr.bf16.mxu0 0
    %837 = vmatpush2.bf16.msra.mxu0 0
    %838 = vmatprep.subr.bf16.mxu0 0
    %839 = vmatpush2.bf16.msra.mxu0 0
    %840 = vmatprep.mubr.bf16.mxu0 0
    %841 = vmatmul.mubr.bf16.gmra.mxu0 %v803
    %v842 = vpop.f32.mrf.mxu0
    %v843 = vadd.f32 0.0, %v842
    %v844 = vpop.f32.mrf.mxu0
    %v845 = vpop.f32.mrf.mxu0
    %v846 = vadd.f32 0.0, %v845
    %v847 = vpop.f32.mrf.mxu0
    %848 = vmatprep.mubr.bf16.mxu0 0
    %849 = vmatmul.mubr.bf16.gmra.mxu0 %v806
    %v850 = vpop.f32.mrf.mxu0
    %v851 = vadd.f32 0.0, %v850
    %v852 = vpop.f32.mrf.mxu0
    %v853 = vpop.f32.mrf.mxu0
    %v854 = vadd.f32 0.0, %v853
    %v855 = vpop.f32.mrf.mxu0
    %856 = vdwg.mxu0
    %v857 = vpack.c.bf16 %v846, %v843
    %v858 = vpack.c.bf16 %v854, %v851
    %859 = vmatprep.subr.bf16.mxu0 0
    %860 = vmatpush1.bf16.msra.mxu0 %v273
    %861 = vmatprep.subr.bf16.mxu0 0
    %862 = vmatpush1.bf16.msra.mxu0 %v272
    %863 = vmatprep.subr.bf16.mxu0 0
    %864 = vmatpush1.bf16.msra.mxu0 %v271
    %865 = vmatprep.subr.bf16.mxu0 0
    %866 = vmatpush1.bf16.msra.mxu0 %v270
    %867 = vmatprep.subr.bf16.mxu0 0
    %868 = vmatpush1.bf16.msra.mxu0 %v269
    %869 = vmatprep.subr.bf16.mxu0 0
    %870 = vmatpush1.bf16.msra.mxu0 %v268
    %871 = vmatprep.subr.bf16.mxu0 0
    %872 = vmatpush1.bf16.msra.mxu0 %v267
    %873 = vmatprep.subr.bf16.mxu0 0
    %874 = vmatpush1.bf16.msra.mxu0 %v266
    %875 = vmatprep.subr.bf16.mxu0 0
    %876 = vmatpush2.bf16.msra.mxu0 0
    %877 = vmatprep.subr.bf16.mxu0 0
    %878 = vmatpush2.bf16.msra.mxu0 0
    %879 = vmatprep.subr.bf16.mxu0 0
    %880 = vmatpush2.bf16.msra.mxu0 0
    %881 = vmatprep.subr.bf16.mxu0 0
    %882 = vmatpush2.bf16.msra.mxu0 0
    %883 = vmatprep.subr.bf16.mxu0 0
    %884 = vmatpush2.bf16.msra.mxu0 0
    %885 = vmatprep.subr.bf16.mxu0 0
    %886 = vmatpush2.bf16.msra.mxu0 0
    %887 = vmatprep.subr.bf16.mxu0 0
    %888 = vmatpush2.bf16.msra.mxu0 0
    %889 = vmatprep.subr.bf16.mxu0 0
    %890 = vmatpush2.bf16.msra.mxu0 0
    %891 = vmatprep.mubr.bf16.mxu0 0
    %892 = vmatmul.mubr.bf16.gmra.mxu0 %v857
    %v893 = vpop.f32.mrf.mxu0
    %v894 = vadd.f32 0.0, %v893
    %v895 = vpop.f32.mrf.mxu0
    %v896 = vpop.f32.mrf.mxu0
    %v897 = vadd.f32 0.0, %v896
    %v898 = vpop.f32.mrf.mxu0
    %899 = vmatprep.mubr.bf16.mxu0 0
    %900 = vmatmul.mubr.bf16.gmra.mxu0 %v858
    %v901 = vpop.f32.mrf.mxu0
    %v902 = vadd.f32 0.0, %v901
    %v903 = vpop.f32.mrf.mxu0
    %v904 = vpop.f32.mrf.mxu0
    %v905 = vadd.f32 0.0, %v904
    %v906 = vpop.f32.mrf.mxu0
    %907 = vdwg.mxu0
    %v908 = vadd.f32 %v654, %v894
    %v909 = vadd.f32 %v655, %v897
    %v910 = vadd.f32 %v656, %v902
    %v911 = vadd.f32 %v657, %v905
    %s912 = scalar_lea.vmem %s6, 32
    %v913 = vld [vmem:[%s912] sm:$0xff]
    %v914 = vld [vmem:[%s912 + $0x8] sm:$0xff]
    %v915 = vld [vmem:[%s912 + $0x10] sm:$0xff]
    %v916 = vld [vmem:[%s912 + $0x18] sm:$0xff]
    %v917 = vsub.f32 0.0, %v908
    %v918 = vsub.f32 0.0, %v909
    %v919 = vsub.f32 0.0, %v910
    %v920 = vsub.f32 0.0, %v911
    %v921 = vmul.f32 %v917, 1.442695
    %v922 = vpow.pop %v921
    %v923 = vmul.f32 %v918, 1.442695
    %v924 = vpow.pop %v923
    %v925 = vmul.f32 %v919, 1.442695
    %v926 = vpow.pop %v925
    %v927 = vmul.f32 %v920, 1.442695
    %v928 = vpow.pop %v927
    %v929 = vadd.f32 %v922, 1.0
    %v930 = vadd.f32 %v924, 1.0
    %v931 = vadd.f32 %v926, 1.0
    %v932 = vadd.f32 %v928, 1.0
    %v933 = vrcp.pop %v929
    %v934 = vrcp.pop %v930
    %v935 = vrcp.pop %v931
    %v936 = vrcp.pop %v932
    %938 = vset.pattern.permute.xlu0 0
    %939 = vperm.xlu0 %938, %v913
    %v940 = vpop.permute.xlu0 %939
    %943 = vset.pattern.permute.xlu0 0
    %944 = vperm.xlu0 %943, %v914
    %v945 = vpop.permute.xlu0 %944
    %948 = vset.pattern.permute.xlu0 0
    %949 = vperm.xlu0 %948, %v915
    %v950 = vpop.permute.xlu0 %949
    %953 = vset.pattern.permute.xlu0 0
    %954 = vperm.xlu0 %953, %v916
    %v955 = vpop.permute.xlu0 %954
    %v957 = vmul.f32 %v940, %v933
    %v958 = vmul.f32 %v945, %v934
    %v959 = vmul.f32 %v950, %v935
    %v960 = vmul.f32 %v955, %v936
    %v961 = vadd.f32 %v781, %v957
    %v962 = vadd.f32 %v782, %v958
    %v963 = vadd.f32 %v783, %v959
    %v964 = vadd.f32 %v784, %v960
    %s965 = scalar_lea.vmem %s7, 32
    %v966 = vld [vmem:[%s965] sm:$0xff]
    %v967 = vld [vmem:[%s965 + $0x8] sm:$0xff]
    %v968 = vld [vmem:[%s965 + $0x10] sm:$0xff]
    %v969 = vld [vmem:[%s965 + $0x18] sm:$0xff]
    %v970 = vsub.f32 0.0, %v961
    %v971 = vsub.f32 0.0, %v962
    %v972 = vsub.f32 0.0, %v963
    %v973 = vsub.f32 0.0, %v964
    %v974 = vmul.f32 %v970, 1.442695
    %v975 = vpow.pop %v974
    %v976 = vmul.f32 %v971, 1.442695
    %v977 = vpow.pop %v976
    %v978 = vmul.f32 %v972, 1.442695
    %v979 = vpow.pop %v978
    %v980 = vmul.f32 %v973, 1.442695
    %v981 = vpow.pop %v980
    %v982 = vadd.f32 %v975, 1.0
    %v983 = vadd.f32 %v977, 1.0
    %v984 = vadd.f32 %v979, 1.0
    %v985 = vadd.f32 %v981, 1.0
    %v986 = vrcp.pop %v982
    %v987 = vrcp.pop %v983
    %v988 = vrcp.pop %v984
    %v989 = vrcp.pop %v985
    %991 = vset.pattern.permute.xlu0 0
    %992 = vperm.xlu0 %991, %v966
    %v993 = vpop.permute.xlu0 %992
    %996 = vset.pattern.permute.xlu0 0
    %997 = vperm.xlu0 %996, %v967
    %v998 = vpop.permute.xlu0 %997
    %1001 = vset.pattern.permute.xlu0 0
    %1002 = vperm.xlu0 %1001, %v968
    %v1003 = vpop.permute.xlu0 %1002
    %1006 = vset.pattern.permute.xlu0 0
    %1007 = vperm.xlu0 %1006, %v969
    %v1008 = vpop.permute.xlu0 %1007
    %v1010 = vmul.f32 %v993, %v986
    %v1011 = vmul.f32 %v998, %v987
    %v1012 = vmul.f32 %v1003, %v988
    %v1013 = vmul.f32 %v1008, %v989
    %v1014 = vadd.f32 %v908, %v1010
    %v1015 = vadd.f32 %v909, %v1011
    %v1016 = vadd.f32 %v910, %v1012
    %v1017 = vadd.f32 %v911, %v1013
    %s1018 = scalar_lea.vmem %s4, 32
    %v1019 = vld [vmem:[%s1018] sm:$0xf]
    %v1020 = vld [vmem:[%s1018 + $0x4] sm:$0xf]
    %v1021 = vld [vmem:[%s1018 + $0x8] sm:$0xf]
    %v1022 = vld [vmem:[%s1018 + $0xc] sm:$0xf]
    %v1023 = vpack.c.bf16 %v1015, %v1014
    %v1024 = vpack.c.bf16 %v1017, %v1016
    %v1029 = vunpack.c.l.b16 %v1019
    %v1030 = vunpack.c.l.b16 %v1020
    %v1031 = vunpack.c.l.b16 %v1021
    %v1032 = vunpack.c.l.b16 %v1022
    %v1033 = vpack.c.b16 %v1030, %v1029
    %v1034 = vpack.c.b16 %v1032, %v1031
    %v1036 = vsel %vm176, %v1033, 0
    %v1039 = vsel %vm176, %v1034, 0
    %1041 = vmatprep.subr.bf16.mxu0 0
    %1042 = vmatpush1.bf16.msra.mxu0 0
    %1043 = vmatprep.subr.bf16.mxu0 0
    %1044 = vmatpush1.bf16.msra.mxu0 0
    %1045 = vmatprep.subr.bf16.mxu0 0
    %1046 = vmatpush1.bf16.msra.mxu0 0
    %1047 = vmatprep.subr.bf16.mxu0 0
    %1048 = vmatpush1.bf16.msra.mxu0 0
    %1049 = vmatprep.subr.bf16.mxu0 0
    %1050 = vmatpush1.bf16.msra.mxu0 0
    %1051 = vmatprep.subr.bf16.mxu0 0
    %1052 = vmatpush1.bf16.msra.mxu0 0
    %1053 = vmatprep.subr.bf16.mxu0 0
    %1054 = vmatpush1.bf16.msra.mxu0 %v1024
    %1055 = vmatprep.subr.bf16.mxu0 0
    %1056 = vmatpush1.bf16.msra.mxu0 %v1023
    %1057 = vmatprep.subr.bf16.mxu0 0
    %1058 = vmatpush2.bf16.msra.mxu0 0
    %1059 = vmatprep.subr.bf16.mxu0 0
    %1060 = vmatpush2.bf16.msra.mxu0 0
    %1061 = vmatprep.subr.bf16.mxu0 0
    %1062 = vmatpush2.bf16.msra.mxu0 0
    %1063 = vmatprep.subr.bf16.mxu0 0
    %1064 = vmatpush2.bf16.msra.mxu0 0
    %1065 = vmatprep.subr.bf16.mxu0 0
    %1066 = vmatpush2.bf16.msra.mxu0 0
    %1067 = vmatprep.subr.bf16.mxu0 0
    %1068 = vmatpush2.bf16.msra.mxu0 0
    %1069 = vmatprep.subr.bf16.mxu0 0
    %1070 = vmatpush2.bf16.msra.mxu0 0
    %1071 = vmatprep.subr.bf16.mxu0 0
    %1072 = vmatpush2.bf16.msra.mxu0 0
    %1073 = vmatprep.mubr.bf16.mxu0 0
    %1074 = vmatmul.mubr.bf16.gmra.mxu0 %v1036
    %v1075 = vpop.f32.mrf.mxu0
    %v1076 = vadd.f32 0.0, %v1075
    %v1077 = vpop.f32.mrf.mxu0
    %v1078 = vpop.f32.mrf.mxu0
    %v1079 = vadd.f32 0.0, %v1078
    %v1080 = vpop.f32.mrf.mxu0
    %1081 = vmatprep.mubr.bf16.mxu0 0
    %1082 = vmatmul.mubr.bf16.gmra.mxu0 %v1039
    %v1083 = vpop.f32.mrf.mxu0
    %v1084 = vadd.f32 0.0, %v1083
    %v1085 = vpop.f32.mrf.mxu0
    %v1086 = vpop.f32.mrf.mxu0
    %v1087 = vadd.f32 0.0, %v1086
    %v1088 = vpop.f32.mrf.mxu0
    %1089 = vdwg.mxu0
    %v1090 = vpack.c.bf16 %v1079, %v1076
    %v1091 = vpack.c.bf16 %v1087, %v1084
    %1092 = vmatprep.subr.bf16.mxu0 0
    %1093 = vmatpush1.bf16.msra.mxu0 %v273
    %1094 = vmatprep.subr.bf16.mxu0 0
    %1095 = vmatpush1.bf16.msra.mxu0 %v272
    %1096 = vmatprep.subr.bf16.mxu0 0
    %1097 = vmatpush1.bf16.msra.mxu0 %v271
    %1098 = vmatprep.subr.bf16.mxu0 0
    %1099 = vmatpush1.bf16.msra.mxu0 %v270
    %1100 = vmatprep.subr.bf16.mxu0 0
    %1101 = vmatpush1.bf16.msra.mxu0 %v269
    %1102 = vmatprep.subr.bf16.mxu0 0
    %1103 = vmatpush1.bf16.msra.mxu0 %v268
    %1104 = vmatprep.subr.bf16.mxu0 0
    %1105 = vmatpush1.bf16.msra.mxu0 %v267
    %1106 = vmatprep.subr.bf16.mxu0 0
    %1107 = vmatpush1.bf16.msra.mxu0 %v266
    %1108 = vmatprep.subr.bf16.mxu0 0
    %1109 = vmatpush2.bf16.msra.mxu0 0
    %1110 = vmatprep.subr.bf16.mxu0 0
    %1111 = vmatpush2.bf16.msra.mxu0 0
    %1112 = vmatprep.subr.bf16.mxu0 0
    %1113 = vmatpush2.bf16.msra.mxu0 0
    %1114 = vmatprep.subr.bf16.mxu0 0
    %1115 = vmatpush2.bf16.msra.mxu0 0
    %1116 = vmatprep.subr.bf16.mxu0 0
    %1117 = vmatpush2.bf16.msra.mxu0 0
    %1118 = vmatprep.subr.bf16.mxu0 0
    %1119 = vmatpush2.bf16.msra.mxu0 0
    %1120 = vmatprep.subr.bf16.mxu0 0
    %1121 = vmatpush2.bf16.msra.mxu0 0
    %1122 = vmatprep.subr.bf16.mxu0 0
    %1123 = vmatpush2.bf16.msra.mxu0 0
    %1124 = vmatprep.mubr.bf16.mxu0 0
    %1125 = vmatmul.mubr.bf16.gmra.mxu0 %v1090
    %v1126 = vpop.f32.mrf.mxu0
    %v1127 = vadd.f32 0.0, %v1126
    %v1128 = vpop.f32.mrf.mxu0
    %v1129 = vpop.f32.mrf.mxu0
    %v1130 = vadd.f32 0.0, %v1129
    %v1131 = vpop.f32.mrf.mxu0
    %1132 = vmatprep.mubr.bf16.mxu0 0
    %1133 = vmatmul.mubr.bf16.gmra.mxu0 %v1091
    %v1134 = vpop.f32.mrf.mxu0
    %v1135 = vadd.f32 0.0, %v1134
    %v1136 = vpop.f32.mrf.mxu0
    %v1137 = vpop.f32.mrf.mxu0
    %v1138 = vadd.f32 0.0, %v1137
    %v1139 = vpop.f32.mrf.mxu0
    %1140 = vdwg.mxu0
    %v1141 = vadd.f32 %v961, %v1127
    %v1142 = vadd.f32 %v962, %v1130
    %v1143 = vadd.f32 %v963, %v1135
    %v1144 = vadd.f32 %v964, %v1138
    %s1145 = scalar_lea.vmem %s5, 32
    %v1146 = vld [vmem:[%s1145] sm:$0xf]
    %v1147 = vld [vmem:[%s1145 + $0x4] sm:$0xf]
    %v1148 = vld [vmem:[%s1145 + $0x8] sm:$0xf]
    %v1149 = vld [vmem:[%s1145 + $0xc] sm:$0xf]
    %v1150 = vpack.c.bf16 %v1142, %v1141
    %v1151 = vpack.c.bf16 %v1144, %v1143
    %v1156 = vunpack.c.l.b16 %v1146
    %v1157 = vunpack.c.l.b16 %v1147
    %v1158 = vunpack.c.l.b16 %v1148
    %v1159 = vunpack.c.l.b16 %v1149
    %v1160 = vpack.c.b16 %v1157, %v1156
    %v1161 = vpack.c.b16 %v1159, %v1158
    %v1163 = vsel %vm176, %v1160, 0
    %v1166 = vsel %vm176, %v1161, 0
    %1168 = vmatprep.subr.bf16.mxu0 0
    %1169 = vmatpush1.bf16.msra.mxu0 0
    %1170 = vmatprep.subr.bf16.mxu0 0
    %1171 = vmatpush1.bf16.msra.mxu0 0
    %1172 = vmatprep.subr.bf16.mxu0 0
    %1173 = vmatpush1.bf16.msra.mxu0 0
    %1174 = vmatprep.subr.bf16.mxu0 0
    %1175 = vmatpush1.bf16.msra.mxu0 0
    %1176 = vmatprep.subr.bf16.mxu0 0
    %1177 = vmatpush1.bf16.msra.mxu0 0
    %1178 = vmatprep.subr.bf16.mxu0 0
    %1179 = vmatpush1.bf16.msra.mxu0 0
    %1180 = vmatprep.subr.bf16.mxu0 0
    %1181 = vmatpush1.bf16.msra.mxu0 %v1151
    %1182 = vmatprep.subr.bf16.mxu0 0
    %1183 = vmatpush1.bf16.msra.mxu0 %v1150
    %1184 = vmatprep.subr.bf16.mxu0 0
    %1185 = vmatpush2.bf16.msra.mxu0 0
    %1186 = vmatprep.subr.bf16.mxu0 0
    %1187 = vmatpush2.bf16.msra.mxu0 0
    %1188 = vmatprep.subr.bf16.mxu0 0
    %1189 = vmatpush2.bf16.msra.mxu0 0
    %1190 = vmatprep.subr.bf16.mxu0 0
    %1191 = vmatpush2.bf16.msra.mxu0 0
    %1192 = vmatprep.subr.bf16.mxu0 0
    %1193 = vmatpush2.bf16.msra.mxu0 0
    %1194 = vmatprep.subr.bf16.mxu0 0
    %1195 = vmatpush2.bf16.msra.mxu0 0
    %1196 = vmatprep.subr.bf16.mxu0 0
    %1197 = vmatpush2.bf16.msra.mxu0 0
    %1198 = vmatprep.subr.bf16.mxu0 0
    %1199 = vmatpush2.bf16.msra.mxu0 0
    %1200 = vmatprep.mubr.bf16.mxu0 0
    %1201 = vmatmul.mubr.bf16.gmra.mxu0 %v1163
    %v1202 = vpop.f32.mrf.mxu0
    %v1203 = vadd.f32 0.0, %v1202
    %v1204 = vpop.f32.mrf.mxu0
    %v1205 = vpop.f32.mrf.mxu0
    %v1206 = vadd.f32 0.0, %v1205
    %v1207 = vpop.f32.mrf.mxu0
    %1208 = vmatprep.mubr.bf16.mxu0 0
    %1209 = vmatmul.mubr.bf16.gmra.mxu0 %v1166
    %v1210 = vpop.f32.mrf.mxu0
    %v1211 = vadd.f32 0.0, %v1210
    %v1212 = vpop.f32.mrf.mxu0
    %v1213 = vpop.f32.mrf.mxu0
    %v1214 = vadd.f32 0.0, %v1213
    %v1215 = vpop.f32.mrf.mxu0
    %1216 = vdwg.mxu0
    %v1217 = vpack.c.bf16 %v1206, %v1203
    %v1218 = vpack.c.bf16 %v1214, %v1211
    %1219 = vmatprep.subr.bf16.mxu0 0
    %1220 = vmatpush1.bf16.msra.mxu0 %v273
    %1221 = vmatprep.subr.bf16.mxu0 0
    %1222 = vmatpush1.bf16.msra.mxu0 %v272
    %1223 = vmatprep.subr.bf16.mxu0 0
    %1224 = vmatpush1.bf16.msra.mxu0 %v271
    %1225 = vmatprep.subr.bf16.mxu0 0
    %1226 = vmatpush1.bf16.msra.mxu0 %v270
    %1227 = vmatprep.subr.bf16.mxu0 0
    %1228 = vmatpush1.bf16.msra.mxu0 %v269
    %1229 = vmatprep.subr.bf16.mxu0 0
    %1230 = vmatpush1.bf16.msra.mxu0 %v268
    %1231 = vmatprep.subr.bf16.mxu0 0
    %1232 = vmatpush1.bf16.msra.mxu0 %v267
    %1233 = vmatprep.subr.bf16.mxu0 0
    %1234 = vmatpush1.bf16.msra.mxu0 %v266
    %1235 = vmatprep.subr.bf16.mxu0 0
    %1236 = vmatpush2.bf16.msra.mxu0 0
    %1237 = vmatprep.subr.bf16.mxu0 0
    %1238 = vmatpush2.bf16.msra.mxu0 0
    %1239 = vmatprep.subr.bf16.mxu0 0
    %1240 = vmatpush2.bf16.msra.mxu0 0
    %1241 = vmatprep.subr.bf16.mxu0 0
    %1242 = vmatpush2.bf16.msra.mxu0 0
    %1243 = vmatprep.subr.bf16.mxu0 0
    %1244 = vmatpush2.bf16.msra.mxu0 0
    %1245 = vmatprep.subr.bf16.mxu0 0
    %1246 = vmatpush2.bf16.msra.mxu0 0
    %1247 = vmatprep.subr.bf16.mxu0 0
    %1248 = vmatpush2.bf16.msra.mxu0 0
    %1249 = vmatprep.subr.bf16.mxu0 0
    %1250 = vmatpush2.bf16.msra.mxu0 0
    %1251 = vmatprep.mubr.bf16.mxu0 0
    %1252 = vmatmul.mubr.bf16.gmra.mxu0 %v1217
    %v1253 = vpop.f32.mrf.mxu0
    %v1254 = vadd.f32 0.0, %v1253
    %v1255 = vpop.f32.mrf.mxu0
    %v1256 = vpop.f32.mrf.mxu0
    %v1257 = vadd.f32 0.0, %v1256
    %v1258 = vpop.f32.mrf.mxu0
    %1259 = vmatprep.mubr.bf16.mxu0 0
    %1260 = vmatmul.mubr.bf16.gmra.mxu0 %v1218
    %v1261 = vpop.f32.mrf.mxu0
    %v1262 = vadd.f32 0.0, %v1261
    %v1263 = vpop.f32.mrf.mxu0
    %v1264 = vpop.f32.mrf.mxu0
    %v1265 = vadd.f32 0.0, %v1264
    %v1266 = vpop.f32.mrf.mxu0
    %1267 = vdwg.mxu0
    %v1268 = vadd.f32 %v1014, %v1254
    %v1269 = vadd.f32 %v1015, %v1257
    %v1270 = vadd.f32 %v1016, %v1262
    %v1271 = vadd.f32 %v1017, %v1265
    %v1272 = vld [vmem:[%s8] sm:$0xf]
    %v1273 = vld [vmem:[%s9] sm:$0xf]
    %1275 = vset.pattern.permute.xlu0 0
    %1276 = vperm.xlu0 %1275, %v1273
    %v1277 = vpop.permute.xlu0 %1276
    %v1280 = vsel %vm176, %v1272, 0
    %1282 = vmatprep.subr.mxu0 0.0
    %1283 = vmatpush1.msra.mxu0 0.0
    %1284 = vmatprep.subr.mxu0 0.0
    %1285 = vmatpush1.msra.mxu0 0.0
    %1286 = vmatprep.subr.mxu0 0.0
    %1287 = vmatpush1.msra.mxu0 0.0
    %1288 = vmatprep.subr.mxu0 0.0
    %1289 = vmatpush1.msra.mxu0 0.0
    %1290 = vmatprep.subr.mxu0 0.0
    %1291 = vmatpush1.msra.mxu0 0.0
    %1292 = vmatprep.subr.mxu0 0.0
    %1293 = vmatpush1.msra.mxu0 0.0
    %1294 = vmatprep.subr.mxu0 0.0
    %1295 = vmatpush1.msra.mxu0 0.0
    %1296 = vmatprep.subr.mxu0 0.0
    %1297 = vmatpush1.msra.mxu0 0.0
    %1298 = vmatprep.subr.mxu0 0.0
    %1299 = vmatpush1.msra.mxu0 0.0
    %1300 = vmatprep.subr.mxu0 0.0
    %1301 = vmatpush1.msra.mxu0 0.0
    %1302 = vmatprep.subr.mxu0 0.0
    %1303 = vmatpush1.msra.mxu0 0.0
    %1304 = vmatprep.subr.mxu0 0.0
    %1305 = vmatpush1.msra.mxu0 0.0
    %1306 = vmatprep.subr.mxu0 0.0
    %1307 = vmatpush1.msra.mxu0 %v1271
    %1308 = vmatprep.subr.mxu0 0.0
    %1309 = vmatpush1.msra.mxu0 %v1270
    %1310 = vmatprep.subr.mxu0 0.0
    %1311 = vmatpush1.msra.mxu0 %v1269
    %1312 = vmatprep.subr.mxu0 0.0
    %1313 = vmatpush1.msra.mxu0 %v1268
    %1314 = vmatprep.subr.mxu0 0.0
    %1315 = vmatpush2.msra.mxu0 0.0
    %1316 = vmatprep.subr.mxu0 0.0
    %1317 = vmatpush2.msra.mxu0 0.0
    %1318 = vmatprep.subr.mxu0 0.0
    %1319 = vmatpush2.msra.mxu0 0.0
    %1320 = vmatprep.subr.mxu0 0.0
    %1321 = vmatpush2.msra.mxu0 0.0
    %1322 = vmatprep.subr.mxu0 0.0
    %1323 = vmatpush2.msra.mxu0 0.0
    %1324 = vmatprep.subr.mxu0 0.0
    %1325 = vmatpush2.msra.mxu0 0.0
    %1326 = vmatprep.subr.mxu0 0.0
    %1327 = vmatpush2.msra.mxu0 0.0
    %1328 = vmatprep.subr.mxu0 0.0
    %1329 = vmatpush2.msra.mxu0 0.0
    %1330 = vmatprep.subr.mxu0 0.0
    %1331 = vmatpush2.msra.mxu0 0.0
    %1332 = vmatprep.subr.mxu0 0.0
    %1333 = vmatpush2.msra.mxu0 0.0
    %1334 = vmatprep.subr.mxu0 0.0
    %1335 = vmatpush2.msra.mxu0 0.0
    %1336 = vmatprep.subr.mxu0 0.0
    %1337 = vmatpush2.msra.mxu0 0.0
    %1338 = vmatprep.subr.mxu0 0.0
    %1339 = vmatpush2.msra.mxu0 0.0
    %1340 = vmatprep.subr.mxu0 0.0
    %1341 = vmatpush2.msra.mxu0 0.0
    %1342 = vmatprep.subr.mxu0 0.0
    %1343 = vmatpush2.msra.mxu0 0.0
    %1344 = vmatprep.subr.mxu0 0.0
    %1345 = vmatpush2.msra.mxu0 0.0
    %1346 = vmatprep.mubr.f32.mxu0 0.0
    %1347 = vmatmul.mubr.f32.gmra.mxu0 %v1280
    %v1348 = vpop.f32.mrf.mxu0
    %v1349 = vadd.f32 %v1277, %v1348
    %v1350 = vpop.f32.mrf.mxu0
    %1351 = vdwg.mxu0
    %1352 = vst [vmem:[#allocation2] sm:$0xf] %v1349
    // Predicated region
    $region42: #{tpu_custom_call.1} parent=1 // pred_check
      _
    $region43: #{tpu_custom_call.1} parent=1 // pred_check_branch
      %1354 = sbr.rel (0) target = $region45
    $region44: #{tpu_custom_call.1} parent=1 // pred_region
      %s1356 = ssub.s32 64, 64
      %1357 = vsyncadd [#allocation3], %s1356
      %s1359 = sshll.u32 [#allocation2], 4
      %s1360 = int_to_ptr.vmem [resolvable:$true] %s1359
      %1362 = dma.vmem_to_hbm [thread:$0]  %s1360, 64, %s10, [#allocation3]
    $region45: #{tpu_custom_call.1} parent=1 // pred_fallthru
      _
    // Predicated region
    $region46: #{tpu_custom_call.1} parent=1 // pred_check
      _
    $region47: #{tpu_custom_call.1} parent=1 // pred_check_branch
      %1364 = sbr.rel (0) target = $region49
    $region48: #{tpu_custom_call.1} parent=1 // pred_region
      %1365 = dma.done [#allocation3], 64
    $region49: #{tpu_custom_call.1} parent=1 // pred_fallthru
      _
    %1366 = vsyncpa [#allocation3], 1

</llo_original>
